<compile_context>
chip_gen: v7x
topology: tpu7x:2x2x1
jax: 0.10.0
libtpu: 0.0.40
codegen_flags: <defaults>
</compile_context>

<pallas_src>
import jax
import jax.numpy as jnp
from jax.experimental import pallas as pl
from jax.experimental.pallas import tpu as pltpu

THRES_EPI = 0.3


# ----------------------------------------------------------------------------
# Helpers (wrapper side)
# ----------------------------------------------------------------------------
def _nearest_resize(x, out_h, out_w):
    """PyTorch F.interpolate(mode='nearest') equivalent for (B, h, w)->(B, H, W)."""
    _, h, w = x.shape
    rows = jnp.minimum((jnp.arange(out_h) * h) // out_h, h - 1).astype(jnp.int32)
    cols = jnp.minimum((jnp.arange(out_w) * w) // out_w, w - 1).astype(jnp.int32)
    return x[:, rows][:, :, cols]


def _pick_tile_rows(H, r_h, W, target_bytes=1 << 20):
    """Largest row-band that divides H, keeps (8,128) alignment for both the
    full-res and low-res blocks, and targets ~1 MiB per full-res f32 tile."""
    target_rows = max(1, target_bytes // max(4 * W, 1))
    best = H  # whole-image rows is always a legal fallback
    for d in range(1, H + 1):
        if H % d or d % r_h:
            continue
        if d != H and d % (8 * r_h):
            continue
        if d <= target_rows:
            best = d
    return best


# ----------------------------------------------------------------------------
# Kernel
# ----------------------------------------------------------------------------
def _expand_rows(x, r):
    """Exact nearest row-upsample (th, w) -> (th*r, w) via 0/1 selection matmul."""
    if r == 1:
        return x
    th = x.shape[0]
    hi = jax.lax.broadcasted_iota(jnp.int32, (th * r, th), 0)   # full-res row
    lo = jax.lax.broadcasted_iota(jnp.int32, (th * r, th), 1)   # low-res row
    sel = ((hi >= lo * r) & (hi < lo * r + r)).astype(jnp.float32)
    return jnp.dot(sel, x, precision=jax.lax.Precision.HIGHEST,
                   preferred_element_type=jnp.float32)


def _expand_cols(x, r):
    """Exact nearest column-upsample (th, w) -> (th, w*r) via 0/1 selection matmul."""
    if r == 1:
        return x
    w = x.shape[1]
    lo = jax.lax.broadcasted_iota(jnp.int32, (w, w * r), 0)     # low-res col
    hi = jax.lax.broadcasted_iota(jnp.int32, (w, w * r), 1)     # full-res col
    sel = ((hi >= lo * r) & (hi < lo * r + r)).astype(jnp.float32)
    return jnp.dot(x, sel, precision=jax.lax.Precision.HIGHEST,
                   preferred_element_type=jnp.float32)


def _make_kernel(r_h, r_w):
    scale = float(r_h * r_w)   # high-res pixels per low-res pixel

    def kernel(gt_ref, depth_ref, epi_ref, filt_ref, sum_ref, cnt_ref):
        gt = gt_ref[0].astype(jnp.float32)            # (TH, W)   full res
        d = depth_ref[0].astype(jnp.float32)          # (th, w)   low res
        conf = jnp.exp(-epi_ref[0].astype(jnp.float32))
        f = filt_ref[0].astype(jnp.float32)

        conf_gate = (conf > THRES_EPI).astype(jnp.float32)
        m_lo = jnp.where(f * conf_gate > 0.5, 1.0, 0.0)   # exact 0/1 mask

        # Fold the mask in at low resolution; nearest upsample commutes with
        # elementwise products, and smooth_l1(m*diff) == m*smooth_l1(diff).
        mc_lo = m_lo * conf          # mask * confidence
        md_lo = mc_lo * d            # mask * confidence * depth_est

        def up(x):
            return _expand_rows(_expand_cols(x, r_w), r_h)

        mc_hi = up(mc_lo)            # (TH, W)
        md_hi = up(md_lo)            # (TH, W)

        diff = md_hi - gt * mc_hi
        ad = jnp.abs(diff)
        sl1 = jnp.where(ad < 1.0, 0.5 * diff * diff, ad - 0.5)

        loss_sum = jnp.sum(sl1)
        count = jnp.sum(m_lo) * scale

        sum_ref[...] = jnp.broadcast_to(loss_sum, sum_ref.shape)
        cnt_ref[...] = jnp.broadcast_to(count, cnt_ref.shape)

    return kernel


# ----------------------------------------------------------------------------
# Wrapper
# ----------------------------------------------------------------------------
def psesup_mask_loss(depth_est, pse_depth_gt, epi, filter_mask):
    """depth_est/epi/filter_mask: (B, h, w); pse_depth_gt: (B, H, W)."""
    B, H, W = pse_depth_gt.shape

    same_lowres = depth_est.shape == epi.shape == filter_mask.shape
    h, w = depth_est.shape[1], depth_est.shape[2]
    fused = same_lowres and (H % h == 0) and (W % w == 0)
    if not fused:
        # General-ratio / mixed-resolution fallback: gather-resize in the
        # wrapper and run the kernel with ratio 1 (still exact semantics).
        depth_est = _nearest_resize(depth_est, H, W)
        epi = _nearest_resize(epi, H, W)
        filter_mask = _nearest_resize(filter_mask, H, W)
        h, w = H, W

    r_h, r_w = H // h, W // w
    TH = _pick_tile_rows(H, r_h, W)
    th = TH // r_h
    n_t = H // TH

    gt_spec = pl.BlockSpec((1, TH, W), lambda b, t: (b, t, 0))
    lo_spec = pl.BlockSpec((1, th, w), lambda b, t: (b, t, 0))
    out_spec = pl.BlockSpec((1, 1, 8, 128), lambda b, t: (b, t, 0, 0))
    out_sds = jax.ShapeDtypeStruct((B, n_t, 8, 128), jnp.float32)

    sums, cnts = pl.pallas_call(
        _make_kernel(r_h, r_w),
        out_shape=(out_sds, out_sds),
        grid_spec=pltpu.PrefetchScalarGridSpec(
            num_scalar_prefetch=0,
            grid=(B, n_t),
            in_specs=[gt_spec, lo_spec, lo_spec, lo_spec],
            out_specs=[out_spec, out_spec],
        ),
        compiler_params=pltpu.CompilerParams(
            dimension_semantics=("parallel", "parallel"),
            vmem_limit_bytes=32 * 1024 * 1024,
        ),
    )(pse_depth_gt, depth_est, epi, filter_mask)

    loss_sum = jnp.sum(sums[:, :, 0, 0])
    count = jnp.sum(cnts[:, :, 0, 0])
    # NaN when no pixel passes the mask, matching torch's mean over an empty select.
    return loss_sum / count


# ----------------------------------------------------------------------------
# Pure-JAX reference mirroring the PyTorch module
# ----------------------------------------------------------------------------
def _psesup_mask_loss_ref(depth_est, pse_depth_gt, epi, filter_mask):
    _, H, W = pse_depth_gt.shape
    conf = _nearest_resize(jnp.exp(-epi.astype(jnp.float32)), H, W)
    d_up = _nearest_resize(depth_est.astype(jnp.float32), H, W)
    f_up = _nearest_resize(filter_mask.astype(jnp.float32), H, W)
    conf_mask = (conf > THRES_EPI).astype(jnp.float32)
    m = (f_up * conf_mask > 0.5).astype(jnp.float32)
    diff = d_up * conf - pse_depth_gt.astype(jnp.float32) * conf
    ad = jnp.abs(diff)
    sl1 = jnp.where(ad < 1.0, 0.5 * diff * diff, ad - 0.5)
    return jnp.sum(sl1 * m) / jnp.sum(m)


if __name__ == "__main__":
    key = jax.random.PRNGKey(0)
    k1, k2, k3, k4 = jax.random.split(key, 4)

    B, H, W = 2, 16, 16       # full-resolution pseudo GT
    h, w = 8, 8               # low-resolution depth / epi / filter mask

    depth_est = jax.random.uniform(k1, (B, h, w), jnp.float32, 0.5, 2.0)
    pse_depth_gt = jax.random.uniform(k2, (B, H, W), jnp.float32, 0.5, 2.0)
    epi = jax.random.uniform(k3, (B, h, w), jnp.float32, 0.0, 2.5)
    filter_mask = (jax.random.uniform(k4, (B, h, w)) > 0.3).astype(jnp.float32)

    loss = jax.block_until_ready(
        psesup_mask_loss(depth_est, pse_depth_gt, epi, filter_mask))
    ref = jax.block_until_ready(
        _psesup_mask_loss_ref(depth_est, pse_depth_gt, epi, filter_mask))

    assert jnp.allclose(loss, ref, rtol=1e-5, atol=1e-6), (loss, ref)
    print("KERNEL_OK")
</pallas_src>

<mosaic_0001>
module attributes {stable_mosaic.version = 11 : i64} {
  func.func @kernel(%arg0: i32, %arg1: i32, %arg2: memref<1x16x16xf32, #tpu.memory_space<vmem>>, %arg3: memref<1x8x8xf32, #tpu.memory_space<vmem>>, %arg4: memref<1x8x8xf32, #tpu.memory_space<vmem>>, %arg5: memref<1x8x8xf32, #tpu.memory_space<vmem>>, %arg6: memref<1x1x8x128xf32, #tpu.memory_space<vmem>>, %arg7: memref<1x1x8x128xf32, #tpu.memory_space<vmem>>) attributes {dimension_semantics = [#tpu.dimension_semantics<parallel>, #tpu.dimension_semantics<parallel>], iteration_bounds = array<i64: 2, 1>, scalar_prefetch = 0 : i64, scratch_operands = 0 : i64, tpu.core_type = #tpu.core_type<tc>, window_params = [{transform_indices = @transform_0, window_bounds = array<i64: 1, 16, 16>}, {transform_indices = @transform_1, window_bounds = array<i64: 1, 8, 8>}, {transform_indices = @transform_2, window_bounds = array<i64: 1, 8, 8>}, {transform_indices = @transform_3, window_bounds = array<i64: 1, 8, 8>}, {transform_indices = @transform_4, window_bounds = array<i64: 1, 1, 8, 128>}, {transform_indices = @transform_5, window_bounds = array<i64: 1, 1, 8, 128>}]} {
    %c0 = arith.constant 0 : index
    %c0_0 = arith.constant 0 : index
    %c0_1 = arith.constant 0 : index
    %0 = vector.load %arg2[%c0, %c0_0, %c0_1] : memref<1x16x16xf32, #tpu.memory_space<vmem>>, vector<1x16x16xf32>
    %1 = vector.shape_cast %0 : vector<1x16x16xf32> to vector<16x16xf32>
    %c0_2 = arith.constant 0 : index
    %c0_3 = arith.constant 0 : index
    %c0_4 = arith.constant 0 : index
    %2 = vector.load %arg3[%c0_2, %c0_3, %c0_4] : memref<1x8x8xf32, #tpu.memory_space<vmem>>, vector<1x8x8xf32>
    %3 = vector.shape_cast %2 : vector<1x8x8xf32> to vector<8x8xf32>
    %c0_5 = arith.constant 0 : index
    %c0_6 = arith.constant 0 : index
    %c0_7 = arith.constant 0 : index
    %4 = vector.load %arg4[%c0_5, %c0_6, %c0_7] : memref<1x8x8xf32, #tpu.memory_space<vmem>>, vector<1x8x8xf32>
    %5 = vector.shape_cast %4 : vector<1x8x8xf32> to vector<8x8xf32>
    %cst = arith.constant 0.000000e+00 : f32
    %6 = vector.broadcast %cst : f32 to vector<8x8xf32>
    %7 = arith.subf %6, %5 : vector<8x8xf32>
    %8 = math.exp %7 : vector<8x8xf32>
    %c0_8 = arith.constant 0 : index
    %c0_9 = arith.constant 0 : index
    %c0_10 = arith.constant 0 : index
    %9 = vector.load %arg5[%c0_8, %c0_9, %c0_10] : memref<1x8x8xf32, #tpu.memory_space<vmem>>, vector<1x8x8xf32>
    %10 = vector.shape_cast %9 : vector<1x8x8xf32> to vector<8x8xf32>
    %cst_11 = arith.constant 3.000000e-01 : f32
    %11 = vector.broadcast %cst_11 : f32 to vector<8x8xf32>
    %12 = arith.cmpf ogt, %8, %11 : vector<8x8xf32>
    %13 = arith.extui %12 : vector<8x8xi1> to vector<8x8xi32>
    %14 = arith.sitofp %13 : vector<8x8xi32> to vector<8x8xf32>
    %15 = arith.mulf %10, %14 : vector<8x8xf32>
    %cst_12 = arith.constant 5.000000e-01 : f32
    %16 = vector.broadcast %cst_12 : f32 to vector<8x8xf32>
    %17 = arith.cmpf ogt, %15, %16 : vector<8x8xf32>
    %cst_13 = arith.constant 1.000000e+00 : f32
    %cst_14 = arith.constant 0.000000e+00 : f32
    %18 = vector.broadcast %cst_13 : f32 to vector<8x8xf32>
    %19 = vector.broadcast %cst_14 : f32 to vector<8x8xf32>
    %20 = arith.select %17, %18, %19 : vector<8x8xi1>, vector<8x8xf32>
    %21 = arith.mulf %20, %8 : vector<8x8xf32>
    %22 = arith.mulf %21, %3 : vector<8x8xf32>
    %23 = tpu.iota {dimensions = array<i32: 0>} : vector<8x16xi32>
    %24 = tpu.iota {dimensions = array<i32: 1>} : vector<8x16xi32>
    %c2_i32 = arith.constant 2 : i32
    %25 = vector.broadcast %c2_i32 : i32 to vector<8x16xi32>
    %26 = arith.muli %23, %25 : vector<8x16xi32>
    %27 = arith.cmpi sge, %24, %26 : vector<8x16xi32>
    %c2_i32_15 = arith.constant 2 : i32
    %28 = vector.broadcast %c2_i32_15 : i32 to vector<8x16xi32>
    %29 = arith.muli %23, %28 : vector<8x16xi32>
    %c2_i32_16 = arith.constant 2 : i32
    %30 = vector.broadcast %c2_i32_16 : i32 to vector<8x16xi32>
    %31 = arith.addi %29, %30 : vector<8x16xi32>
    %32 = arith.cmpi slt, %24, %31 : vector<8x16xi32>
    %33 = arith.andi %27, %32 : vector<8x16xi1>
    %34 = arith.extui %33 : vector<8x16xi1> to vector<8x16xi32>
    %35 = arith.sitofp %34 : vector<8x16xi32> to vector<8x16xf32>
    %cst_17 = arith.constant dense<0.000000e+00> : vector<8x16xf32>
    %36 = tpu.matmul %21, %35, %cst_17 {dimension_numbers = #tpu.dot_dimension_numbers<[1], [0], [0], [1], [0, 0, 1, 1], [], []>, precision = #tpu.contract_precision<fp32>} : vector<8x8xf32>, vector<8x16xf32>, vector<8x16xf32> -> vector<8x16xf32>
    %37 = tpu.iota {dimensions = array<i32: 0>} : vector<16x8xi32>
    %38 = tpu.iota {dimensions = array<i32: 1>} : vector<16x8xi32>
    %c2_i32_18 = arith.constant 2 : i32
    %39 = vector.broadcast %c2_i32_18 : i32 to vector<16x8xi32>
    %40 = arith.muli %38, %39 : vector<16x8xi32>
    %41 = arith.cmpi sge, %37, %40 : vector<16x8xi32>
    %c2_i32_19 = arith.constant 2 : i32
    %42 = vector.broadcast %c2_i32_19 : i32 to vector<16x8xi32>
    %43 = arith.muli %38, %42 : vector<16x8xi32>
    %c2_i32_20 = arith.constant 2 : i32
    %44 = vector.broadcast %c2_i32_20 : i32 to vector<16x8xi32>
    %45 = arith.addi %43, %44 : vector<16x8xi32>
    %46 = arith.cmpi slt, %37, %45 : vector<16x8xi32>
    %47 = arith.andi %41, %46 : vector<16x8xi1>
    %48 = arith.extui %47 : vector<16x8xi1> to vector<16x8xi32>
    %49 = arith.sitofp %48 : vector<16x8xi32> to vector<16x8xf32>
    %cst_21 = arith.constant dense<0.000000e+00> : vector<16x16xf32>
    %50 = tpu.matmul %49, %36, %cst_21 {dimension_numbers = #tpu.dot_dimension_numbers<[1], [0], [0], [1], [0, 0, 1, 1], [], []>, precision = #tpu.contract_precision<fp32>} : vector<16x8xf32>, vector<8x16xf32>, vector<16x16xf32> -> vector<16x16xf32>
    %51 = tpu.iota {dimensions = array<i32: 0>} : vector<8x16xi32>
    %52 = tpu.iota {dimensions = array<i32: 1>} : vector<8x16xi32>
    %c2_i32_22 = arith.constant 2 : i32
    %53 = vector.broadcast %c2_i32_22 : i32 to vector<8x16xi32>
    %54 = arith.muli %51, %53 : vector<8x16xi32>
    %55 = arith.cmpi sge, %52, %54 : vector<8x16xi32>
    %c2_i32_23 = arith.constant 2 : i32
    %56 = vector.broadcast %c2_i32_23 : i32 to vector<8x16xi32>
    %57 = arith.muli %51, %56 : vector<8x16xi32>
    %c2_i32_24 = arith.constant 2 : i32
    %58 = vector.broadcast %c2_i32_24 : i32 to vector<8x16xi32>
    %59 = arith.addi %57, %58 : vector<8x16xi32>
    %60 = arith.cmpi slt, %52, %59 : vector<8x16xi32>
    %61 = arith.andi %55, %60 : vector<8x16xi1>
    %62 = arith.extui %61 : vector<8x16xi1> to vector<8x16xi32>
    %63 = arith.sitofp %62 : vector<8x16xi32> to vector<8x16xf32>
    %cst_25 = arith.constant dense<0.000000e+00> : vector<8x16xf32>
    %64 = tpu.matmul %22, %63, %cst_25 {dimension_numbers = #tpu.dot_dimension_numbers<[1], [0], [0], [1], [0, 0, 1, 1], [], []>, precision = #tpu.contract_precision<fp32>} : vector<8x8xf32>, vector<8x16xf32>, vector<8x16xf32> -> vector<8x16xf32>
    %65 = tpu.iota {dimensions = array<i32: 0>} : vector<16x8xi32>
    %66 = tpu.iota {dimensions = array<i32: 1>} : vector<16x8xi32>
    %c2_i32_26 = arith.constant 2 : i32
    %67 = vector.broadcast %c2_i32_26 : i32 to vector<16x8xi32>
    %68 = arith.muli %66, %67 : vector<16x8xi32>
    %69 = arith.cmpi sge, %65, %68 : vector<16x8xi32>
    %c2_i32_27 = arith.constant 2 : i32
    %70 = vector.broadcast %c2_i32_27 : i32 to vector<16x8xi32>
    %71 = arith.muli %66, %70 : vector<16x8xi32>
    %c2_i32_28 = arith.constant 2 : i32
    %72 = vector.broadcast %c2_i32_28 : i32 to vector<16x8xi32>
    %73 = arith.addi %71, %72 : vector<16x8xi32>
    %74 = arith.cmpi slt, %65, %73 : vector<16x8xi32>
    %75 = arith.andi %69, %74 : vector<16x8xi1>
    %76 = arith.extui %75 : vector<16x8xi1> to vector<16x8xi32>
    %77 = arith.sitofp %76 : vector<16x8xi32> to vector<16x8xf32>
    %cst_29 = arith.constant dense<0.000000e+00> : vector<16x16xf32>
    %78 = tpu.matmul %77, %64, %cst_29 {dimension_numbers = #tpu.dot_dimension_numbers<[1], [0], [0], [1], [0, 0, 1, 1], [], []>, precision = #tpu.contract_precision<fp32>} : vector<16x8xf32>, vector<8x16xf32>, vector<16x16xf32> -> vector<16x16xf32>
    %79 = arith.mulf %1, %50 : vector<16x16xf32>
    %80 = arith.subf %78, %79 : vector<16x16xf32>
    %81 = math.absf %80 : vector<16x16xf32>
    %cst_30 = arith.constant 1.000000e+00 : f32
    %82 = vector.broadcast %cst_30 : f32 to vector<16x16xf32>
    %83 = arith.cmpf olt, %81, %82 : vector<16x16xf32>
    %cst_31 = arith.constant 5.000000e-01 : f32
    %84 = vector.broadcast %cst_31 : f32 to vector<16x16xf32>
    %85 = arith.mulf %84, %80 : vector<16x16xf32>
    %86 = arith.mulf %85, %80 : vector<16x16xf32>
    %cst_32 = arith.constant 5.000000e-01 : f32
    %87 = vector.broadcast %cst_32 : f32 to vector<16x16xf32>
    %88 = arith.subf %81, %87 : vector<16x16xf32>
    %89 = arith.select %83, %86, %88 : vector<16x16xi1>, vector<16x16xf32>
    %90 = vector.shape_cast %89 : vector<16x16xf32> to vector<1x16x16xf32>
    %cst_33 = arith.constant dense<0.000000e+00> : vector<1xf32>
    %91 = vector.multi_reduction <add>, %90, %cst_33 [1, 2] : vector<1x16x16xf32> to vector<1xf32>
    %92 = vector.shape_cast %91 : vector<1xf32> to vector<1x1x1xf32>
    %93 = vector.extract %92[0, 0, 0] : f32 from vector<1x1x1xf32>
    %94 = vector.shape_cast %20 : vector<8x8xf32> to vector<1x8x8xf32>
    %cst_34 = arith.constant dense<0.000000e+00> : vector<1xf32>
    %95 = vector.multi_reduction <add>, %94, %cst_34 [1, 2] : vector<1x8x8xf32> to vector<1xf32>
    %96 = vector.shape_cast %95 : vector<1xf32> to vector<1x1x1xf32>
    %97 = vector.extract %96[0, 0, 0] : f32 from vector<1x1x1xf32>
    %cst_35 = arith.constant 4.000000e+00 : f32
    %98 = arith.mulf %97, %cst_35 : f32
    %99 = vector.broadcast %93 : f32 to vector<1x1x8x128xf32>
    %c0_36 = arith.constant 0 : index
    %c0_37 = arith.constant 0 : index
    %c0_38 = arith.constant 0 : index
    %c0_39 = arith.constant 0 : index
    %100 = vector.load %arg6[%c0_36, %c0_37, %c0_38, %c0_39] : memref<1x1x8x128xf32, #tpu.memory_space<vmem>>, vector<1x1x8x128xf32>
    tpu.vector_store %arg6[%c0_36, %c0_37, %c0_38, %c0_39], %99 {strides = array<i32>} : memref<1x1x8x128xf32, #tpu.memory_space<vmem>>, vector<1x1x8x128xf32>,
    %101 = vector.broadcast %98 : f32 to vector<1x1x8x128xf32>
    %c0_40 = arith.constant 0 : index
    %c0_41 = arith.constant 0 : index
    %c0_42 = arith.constant 0 : index
    %c0_43 = arith.constant 0 : index
    %102 = vector.load %arg7[%c0_40, %c0_41, %c0_42, %c0_43] : memref<1x1x8x128xf32, #tpu.memory_space<vmem>>, vector<1x1x8x128xf32>
    tpu.vector_store %arg7[%c0_40, %c0_41, %c0_42, %c0_43], %101 {strides = array<i32>} : memref<1x1x8x128xf32, #tpu.memory_space<vmem>>, vector<1x1x8x128xf32>,
    return
  }
  func.func @transform_0(%arg0: i32, %arg1: i32) -> (i32, i32, i32) {
    %c0_i32 = arith.constant 0 : i32
    %c0_i32_0 = arith.constant 0 : i32
    return %arg0, %arg1, %c0_i32 : i32, i32, i32
  }
  func.func @transform_1(%arg0: i32, %arg1: i32) -> (i32, i32, i32) {
    %c0_i32 = arith.constant 0 : i32
    %c0_i32_0 = arith.constant 0 : i32
    return %arg0, %arg1, %c0_i32 : i32, i32, i32
  }
  func.func @transform_2(%arg0: i32, %arg1: i32) -> (i32, i32, i32) {
    %c0_i32 = arith.constant 0 : i32
    %c0_i32_0 = arith.constant 0 : i32
    return %arg0, %arg1, %c0_i32 : i32, i32, i32
  }
  func.func @transform_3(%arg0: i32, %arg1: i32) -> (i32, i32, i32) {
    %c0_i32 = arith.constant 0 : i32
    %c0_i32_0 = arith.constant 0 : i32
    return %arg0, %arg1, %c0_i32 : i32, i32, i32
  }
  func.func @transform_4(%arg0: i32, %arg1: i32) -> (i32, i32, i32, i32) {
    %c0_i32 = arith.constant 0 : i32
    %c0_i32_0 = arith.constant 0 : i32
    %c0_i32_1 = arith.constant 0 : i32
    return %arg0, %arg1, %c0_i32, %c0_i32_0 : i32, i32, i32, i32
  }
  func.func @transform_5(%arg0: i32, %arg1: i32) -> (i32, i32, i32, i32) {
    %c0_i32 = arith.constant 0 : i32
    %c0_i32_0 = arith.constant 0 : i32
    %c0_i32_1 = arith.constant 0 : i32
    return %arg0, %arg1, %c0_i32, %c0_i32_0 : i32, i32, i32, i32
  }
}

</mosaic_0001>

<llo_original>
// kernel: tpu_custom_call.1
$region0: #{tpu_custom_call.1}
  #allocation0 [shape = 'u32[]', space=smem, size = 0x4, offset = 0x4, fixed_abs, tag = 'smem constant byte address 0x4 - core index']
  #allocation1 [shape = 'u32[144,128]{1,0:T(1,128)}', space=vmem, size = 0x12000, scoped, tag = 'internal scratch']
  %s0 = inlined_call_operand.hbm [shape: f32[2,16,16], index: 0, kind: input, shape index: {}]
  %s1 = inlined_call_operand.hbm [shape: f32[2,8,8], index: 1, kind: input, shape index: {}]
  %s2 = inlined_call_operand.hbm [shape: f32[2,8,8], index: 2, kind: input, shape index: {}]
  %s3 = inlined_call_operand.hbm [shape: f32[2,8,8], index: 3, kind: input, shape index: {}]
  %s4 = inlined_call_operand.hbm [shape: f32[2,1,8,128], index: 4, kind: output, shape index: {0}]
  %s5 = inlined_call_operand.hbm [shape: f32[2,1,8,128], index: 5, kind: output, shape index: {1}]
  %6 = xla_tuple %s4, %s5
  %s7 = sld [smem:[#allocation0]]
  $region73: #{tpu_custom_call.1} parent=0
    _
  %s9 = ssub.s32 1, %s7
  %s10 = scalar_select 0, %s9, %s7
  $region1: #{tpu_custom_call.1} parent=0
    #allocation2 [shape = 'u8[16384]{0}', space=vmem, size = 0x4000, scoped, tag = 'input window, operand 0']
    #allocation3 [shape = 's32[2]{0}', space=sflag, size = 0x8, scoped, tag = 'scoped memory for tpu_custom_call.1']
    #allocation4 [shape = 's32[2]{0}', space=sflag, size = 0x8, scoped, tag = 'scoped memory for tpu_custom_call.1']
    #allocation5 [shape = 'u8[8192]{0}', space=vmem, size = 0x2000, scoped, tag = 'input window, operand 1']
    #allocation6 [shape = 's32[2]{0}', space=sflag, size = 0x8, scoped, tag = 'scoped memory for tpu_custom_call.1']
    #allocation7 [shape = 'u8[8192]{0}', space=vmem, size = 0x2000, scoped, tag = 'input window, operand 2']
    #allocation8 [shape = 'u8[8192]{0}', space=vmem, size = 0x2000, scoped, tag = 'input window, operand 3']
    #allocation9 [shape = 's32[2]{0}', space=sflag, size = 0x8, scoped, tag = 'scoped memory for tpu_custom_call.1']
    #allocation10 [shape = 'u8[8192]{0}', space=vmem, size = 0x2000, scoped, tag = 'output window, operand 0']
    #allocation11 [shape = 'u8[8192]{0}', space=vmem, size = 0x2000, scoped, tag = 'output window, operand 1']
    #allocation12 [shape = 's32[2]{0}', space=sflag, size = 0x8, scoped, tag = 'scoped memory for tpu_custom_call.1']
    %11 = vsyncpa [#allocation3], 0
    %s12 = scalar_lea.sflag [#allocation3], 1
    %13 = vsyncpa %s12, 0
    %14 = vsyncpa [#allocation6], 0
    %s15 = scalar_lea.sflag [#allocation6], 1
    %16 = vsyncpa %s15, 0
    %17 = vsyncpa [#allocation9], 0
    %s18 = scalar_lea.sflag [#allocation9], 1
    %19 = vsyncpa %s18, 0
    %20 = vsyncpa [#allocation4], 0
    %s21 = scalar_lea.sflag [#allocation4], 1
    %22 = vsyncpa %s21, 0
    %23 = vsyncpa [#allocation12], 0
    %s24 = scalar_lea.sflag [#allocation12], 1
    %25 = vsyncpa %s24, 0
    loop: start=0, step=1, limit=4
    $region2: #{tpu_custom_call.1} parent=1 // loop_pre_header
      _
    $region3: #{tpu_custom_call.1} parent=1 // loop_header
      %s27 = sphi 0, %s31
      %p28 = scmp.ge.s32.totalorder %s27, 4
      %s34 = sphi 0, %s46
      %s35 = sphi 0, %s42
      %s36 = sphi 0, %s34
      %s37 = sphi 0, %s35
      %s38 = sphi 0, %s36
      %s39 = sphi 0, %s37
      %s51 = sphi 0, %s53
      %s54 = sphi 0, %s51
      %s55 = sphi 0, %s54
      %s71 = sphi 0, %s55
      %s79 = sphi 0, %s81
      %s82 = sphi 0, %s79
      %s83 = sphi 0, %s82
      %s99 = sphi 0, %s83
      %s107 = sphi 0, %s109
      %s110 = sphi 0, %s107
      %s111 = sphi 0, %s110
      %s127 = sphi 0, %s111
      %s135 = sphi 0, %s137
      %s138 = sphi 0, %s135
      %s139 = sphi 0, %s138
      %s155 = sphi 0, %s139
      %s163 = sphi 0, %s165
      %s166 = sphi 0, %s163
      %s167 = sphi 0, %s166
      %s183 = sphi 0, %s167
      %s191 = sphi 0, %s193
      %s194 = sphi 0, %s191
      %s195 = sphi 0, %s194
      %s211 = sphi 0, %s195
    $region4: #{tpu_custom_call.1} parent=1 // loop_header_branch
      %30 = sbr.rel (%p28) target = $region8
    $region5: #{tpu_custom_call.1} parent=1 // loop_body
      %s32 = ssub.s32 %s27, 1
      %s33 = ssub.s32 %s27, 2
      %s40 = sadd.s32 1, %s35
      %p41 = scmp.ge.s32.totalorder %s40, 1
      %s42 = scalar_select %p41, 0, %s40
      %s43 = sadd.s32 1, %s34
      %s44 = scalar_select %p41, %s43, %s34
      %p45 = scmp.ge.s32.totalorder %s44, 2
      %s46 = scalar_select %p45, 0, %s44
      %s47 = ssub.s32 %s34, %s46
      %s48 = ssub.s32 %s35, %s42
      %s49 = sor.u32 %s47, %s48
      %p50 = scmp.eq.s32.totalorder %s49, 0
      %s52 = sadd.s32 %s51, 1
      %s53 = scalar_select %p50, %s51, %s52
      %p56 = pneg %p50
      %p57 = scmp.eq.s32.totalorder %s27, 1
      %p58 = por %p56, %p57
      %p59 = scmp.ne.s32.totalorder %s51, %s54
      %p60 = scmp.eq.s32.totalorder %s27, 0
      %p61 = por %p59, %p60
      %p62 = scmp.ne.s32.totalorder %s51, %s54
      %p63 = scmp.eq.s32.totalorder %s32, 1
      %p64 = por %p62, %p63
      %p65 = scmp.ne.s32.totalorder %s54, %s55
      %p66 = scmp.eq.s32.totalorder %s32, 0
      %p67 = por %p65, %p66
      %p68 = scmp.ne.s32.totalorder %s54, %s55
      %p69 = scmp.eq.s32.totalorder %s33, 1
      %p70 = por %p68, %p69
      %p72 = scmp.ne.s32.totalorder %s55, %s71
      %p73 = scmp.eq.s32.totalorder %s33, 0
      %p74 = por %p72, %p73
      %s75 = ssub.s32 %s34, %s46
      %s76 = ssub.s32 %s35, %s42
      %s77 = sor.u32 %s75, %s76
      %p78 = scmp.eq.s32.totalorder %s77, 0
      %s80 = sadd.s32 %s79, 1
      %s81 = scalar_select %p78, %s79, %s80
      %p84 = pneg %p78
      %p85 = scmp.eq.s32.totalorder %s27, 1
      %p86 = por %p84, %p85
      %p87 = scmp.ne.s32.totalorder %s79, %s82
      %p88 = scmp.eq.s32.totalorder %s27, 0
      %p89 = por %p87, %p88
      %p90 = scmp.ne.s32.totalorder %s79, %s82
      %p91 = scmp.eq.s32.totalorder %s32, 1
      %p92 = por %p90, %p91
      %p93 = scmp.ne.s32.totalorder %s82, %s83
      %p94 = scmp.eq.s32.totalorder %s32, 0
      %p95 = por %p93, %p94
      %p96 = scmp.ne.s32.totalorder %s82, %s83
      %p97 = scmp.eq.s32.totalorder %s33, 1
      %p98 = por %p96, %p97
      %p100 = scmp.ne.s32.totalorder %s83, %s99
      %p101 = scmp.eq.s32.totalorder %s33, 0
      %p102 = por %p100, %p101
      %s103 = ssub.s32 %s34, %s46
      %s104 = ssub.s32 %s35, %s42
      %s105 = sor.u32 %s103, %s104
      %p106 = scmp.eq.s32.totalorder %s105, 0
      %s108 = sadd.s32 %s107, 1
      %s109 = scalar_select %p106, %s107, %s108
      %p112 = pneg %p106
      %p113 = scmp.eq.s32.totalorder %s27, 1
      %p114 = por %p112, %p113
      %p115 = scmp.ne.s32.totalorder %s107, %s110
      %p116 = scmp.eq.s32.totalorder %s27, 0
      %p117 = por %p115, %p116
      %p118 = scmp.ne.s32.totalorder %s107, %s110
      %p119 = scmp.eq.s32.totalorder %s32, 1
      %p120 = por %p118, %p119
      %p121 = scmp.ne.s32.totalorder %s110, %s111
      %p122 = scmp.eq.s32.totalorder %s32, 0
      %p123 = por %p121, %p122
      %p124 = scmp.ne.s32.totalorder %s110, %s111
      %p125 = scmp.eq.s32.totalorder %s33, 1
      %p126 = por %p124, %p125
      %p128 = scmp.ne.s32.totalorder %s111, %s127
      %p129 = scmp.eq.s32.totalorder %s33, 0
      %p130 = por %p128, %p129
      %s131 = ssub.s32 %s34, %s46
      %s132 = ssub.s32 %s35, %s42
      %s133 = sor.u32 %s131, %s132
      %p134 = scmp.eq.s32.totalorder %s133, 0
      %s136 = sadd.s32 %s135, 1
      %s137 = scalar_select %p134, %s135, %s136
      %p140 = pneg %p134
      %p141 = scmp.eq.s32.totalorder %s27, 1
      %p142 = por %p140, %p141
      %p143 = scmp.ne.s32.totalorder %s135, %s138
      %p144 = scmp.eq.s32.totalorder %s27, 0
      %p145 = por %p143, %p144
      %p146 = scmp.ne.s32.totalorder %s135, %s138
      %p147 = scmp.eq.s32.totalorder %s32, 1
      %p148 = por %p146, %p147
      %p149 = scmp.ne.s32.totalorder %s138, %s139
      %p150 = scmp.eq.s32.totalorder %s32, 0
      %p151 = por %p149, %p150
      %p152 = scmp.ne.s32.totalorder %s138, %s139
      %p153 = scmp.eq.s32.totalorder %s33, 1
      %p154 = por %p152, %p153
      %p156 = scmp.ne.s32.totalorder %s139, %s155
      %p157 = scmp.eq.s32.totalorder %s33, 0
      %p158 = por %p156, %p157
      %s159 = ssub.s32 %s34, %s46
      %s160 = ssub.s32 %s35, %s42
      %s161 = sor.u32 %s159, %s160
      %p162 = scmp.eq.s32.totalorder %s161, 0
      %s164 = sadd.s32 %s163, 1
      %s165 = scalar_select %p162, %s163, %s164
      %p168 = pneg %p162
      %p169 = scmp.eq.s32.totalorder %s27, 1
      %p170 = por %p168, %p169
      %p171 = scmp.ne.s32.totalorder %s163, %s166
      %p172 = scmp.eq.s32.totalorder %s27, 0
      %p173 = por %p171, %p172
      %p174 = scmp.ne.s32.totalorder %s163, %s166
      %p175 = scmp.eq.s32.totalorder %s32, 1
      %p176 = por %p174, %p175
      %p177 = scmp.ne.s32.totalorder %s166, %s167
      %p178 = scmp.eq.s32.totalorder %s32, 0
      %p179 = por %p177, %p178
      %p180 = scmp.ne.s32.totalorder %s166, %s167
      %p181 = scmp.eq.s32.totalorder %s33, 1
      %p182 = por %p180, %p181
      %p184 = scmp.ne.s32.totalorder %s167, %s183
      %p185 = scmp.eq.s32.totalorder %s33, 0
      %p186 = por %p184, %p185
      %s187 = ssub.s32 %s34, %s46
      %s188 = ssub.s32 %s35, %s42
      %s189 = sor.u32 %s187, %s188
      %p190 = scmp.eq.s32.totalorder %s189, 0
      %s192 = sadd.s32 %s191, 1
      %s193 = scalar_select %p190, %s191, %s192
      %p196 = pneg %p190
      %p197 = scmp.eq.s32.totalorder %s27, 1
      %p198 = por %p196, %p197
      %p199 = scmp.ne.s32.totalorder %s191, %s194
      %p200 = scmp.eq.s32.totalorder %s27, 0
      %p201 = por %p199, %p200
      %p202 = scmp.ne.s32.totalorder %s191, %s194
      %p203 = scmp.eq.s32.totalorder %s32, 1
      %p204 = por %p202, %p203
      %p205 = scmp.ne.s32.totalorder %s194, %s195
      %p206 = scmp.eq.s32.totalorder %s32, 0
      %p207 = por %p205, %p206
      %p208 = scmp.ne.s32.totalorder %s194, %s195
      %p209 = scmp.eq.s32.totalorder %s33, 1
      %p210 = por %p208, %p209
      %p212 = scmp.ne.s32.totalorder %s195, %s211
      %p213 = scmp.eq.s32.totalorder %s33, 0
      %p214 = por %p212, %p213
      %p215 = scmp.le.s32.totalorder 1, %s27
      %p216 = scmp.lt.s32.totalorder %s27, 3
      %p217 = pnand %p215, %p216
      %p218 = pneg %p217
      // Predicated region
      $region9: #{tpu_custom_call.1} parent=5 // pred_check
        _
      $region10: #{tpu_custom_call.1} parent=5 // pred_check_branch
        %220 = sbr.rel (%p217) target = $region12
      $region11: #{tpu_custom_call.1} parent=5 // pred_region
        %s221 = ssub.s32 %s27, 1
      $region12: #{tpu_custom_call.1} parent=5 // pred_fallthru
        _
      %p222 = scmp.lt.s32.totalorder %s27, 2
      // Predicated region
      $region13: #{tpu_custom_call.1} parent=5 // pred_check
        %p223 = pneg %p222
      $region14: #{tpu_custom_call.1} parent=5 // pred_check_branch
        %225 = sbr.rel (%p223) target = $region16
      $region15: #{tpu_custom_call.1} parent=5 // pred_region
        // Predicated region
        $region17: #{tpu_custom_call.1} parent=15 // pred_check
          %p226 = pneg %p61
        $region18: #{tpu_custom_call.1} parent=15 // pred_check_branch
          %228 = sbr.rel (%p226) target = $region20
        $region19: #{tpu_custom_call.1} parent=15 // pred_region
          %s229 = sand.u32 %s51, 1
          %s230 = scalar_lea.sflag [#allocation3], %s229
          %s231 = sand.u32 %s51, 1
          %s232 = smul.addr %s231, 16
          %s233 = scalar_lea.vmem [#allocation2], %s232
          %s234 = smul.u32 2, %s35
          %s236 = ssub.s32 256, 256
          %237 = vsyncadd %s230, %s236
          %s238 = smul.addr %s34, 2
          %s239 = sadd.s32 %s234, %s238
          %s240 = smul.addr %s239, 128
          %s241 = scalar_lea.hbm %s0, %s240
          %s242 = sshll.u32 %s233, 4
          %s243 = int_to_ptr.vmem [resolvable:$true] %s242
          %248 = dma.hbm_to_vmem [thread:$0]  %s241, 256, %s243, %s230, 128, 128, 8
        $region20: #{tpu_custom_call.1} parent=15 // pred_fallthru
          _
        // Predicated region
        $region21: #{tpu_custom_call.1} parent=15 // pred_check
          %p249 = pneg %p89
        $region22: #{tpu_custom_call.1} parent=15 // pred_check_branch
          %251 = sbr.rel (%p249) target = $region24
        $region23: #{tpu_custom_call.1} parent=15 // pred_region
          %s252 = sand.u32 %s27, 1
          %s253 = scalar_lea.sflag [#allocation6], %s252
          %s254 = sand.u32 %s79, 1
          %s255 = smul.addr %s254, 8
          %s256 = scalar_lea.vmem [#allocation5], %s255
          %s258 = ssub.s32 128, 128
          %259 = vsyncadd %s253, %s258
          %s260 = sadd.s32 %s35, %s34
          %s261 = smul.addr %s260, 128
          %s262 = scalar_lea.hbm %s1, %s261
          %s264 = sshll.u32 %s256, 4
          %s265 = int_to_ptr.vmem [resolvable:$true] %s264
          %267 = dma.hbm_to_vmem [thread:$0]  %s262, 128, %s265, %s253
        $region24: #{tpu_custom_call.1} parent=15 // pred_fallthru
          _
        // Predicated region
        $region25: #{tpu_custom_call.1} parent=15 // pred_check
          %p268 = pneg %p117
        $region26: #{tpu_custom_call.1} parent=15 // pred_check_branch
          %270 = sbr.rel (%p268) target = $region28
        $region27: #{tpu_custom_call.1} parent=15 // pred_region
          %s271 = sand.u32 %s27, 1
          %s272 = scalar_lea.sflag [#allocation6], %s271
          %s273 = sand.u32 %s107, 1
          %s274 = smul.addr %s273, 8
          %s275 = scalar_lea.vmem [#allocation7], %s274
          %s277 = ssub.s32 128, 128
          %278 = vsyncadd %s272, %s277
          %s279 = sadd.s32 %s35, %s34
          %s280 = smul.addr %s279, 128
          %s281 = scalar_lea.hbm %s2, %s280
          %s283 = sshll.u32 %s275, 4
          %s284 = int_to_ptr.vmem [resolvable:$true] %s283
          %286 = dma.hbm_to_vmem [thread:$0]  %s281, 128, %s284, %s272
        $region28: #{tpu_custom_call.1} parent=15 // pred_fallthru
          _
        // Predicated region
        $region29: #{tpu_custom_call.1} parent=15 // pred_check
          %p287 = pneg %p145
        $region30: #{tpu_custom_call.1} parent=15 // pred_check_branch
          %289 = sbr.rel (%p287) target = $region32
        $region31: #{tpu_custom_call.1} parent=15 // pred_region
          %s290 = sand.u32 %s135, 1
          %s291 = scalar_lea.sflag [#allocation9], %s290
          %s292 = sand.u32 %s135, 1
          %s293 = smul.addr %s292, 8
          %s294 = scalar_lea.vmem [#allocation8], %s293
          %s296 = ssub.s32 128, 128
          %297 = vsyncadd %s291, %s296
          %s298 = sadd.s32 %s35, %s34
          %s299 = smul.addr %s298, 128
          %s300 = scalar_lea.hbm %s3, %s299
          %s302 = sshll.u32 %s294, 4
          %s303 = int_to_ptr.vmem [resolvable:$true] %s302
          %305 = dma.hbm_to_vmem [thread:$0]  %s300, 128, %s303, %s291
        $region32: #{tpu_custom_call.1} parent=15 // pred_fallthru
          _
      $region16: #{tpu_custom_call.1} parent=5 // pred_fallthru
        _
      %p306 = scmp.le.s32.totalorder 1, %s27
      %p307 = scmp.lt.s32.totalorder %s27, 3
      %p308 = pnand %p306, %p307
      %p309 = pneg %p308
      // Predicated region
      $region33: #{tpu_custom_call.1} parent=5 // pred_check
        _
      $region34: #{tpu_custom_call.1} parent=5 // pred_check_branch
        %311 = sbr.rel (%p308) target = $region36
      $region35: #{tpu_custom_call.1} parent=5 // pred_region
        %s312 = ssub.s32 %s27, 1
        %s313 = sand.u32 %s54, 1
        %s314 = scalar_lea.sflag [#allocation3], %s313
        %s315 = sand.u32 %s54, 1
        %s316 = smul.addr %s315, 16
        %s317 = scalar_lea.vmem [#allocation2], %s316
        // Predicated region
        $region37: #{tpu_custom_call.1} parent=35 // pred_check
          %p318 = pneg %p67
        $region38: #{tpu_custom_call.1} parent=35 // pred_check_branch
          %320 = sbr.rel (%p318) target = $region40
        $region39: #{tpu_custom_call.1} parent=35 // pred_region
          %321 = dma.done %s314, 256
        $region40: #{tpu_custom_call.1} parent=35 // pred_fallthru
          _
        %s322 = sand.u32 %s32, 1
        %s323 = scalar_lea.sflag [#allocation6], %s322
        %s324 = sand.u32 %s82, 1
        %s325 = smul.addr %s324, 8
        %s326 = scalar_lea.vmem [#allocation5], %s325
        // Predicated region
        $region41: #{tpu_custom_call.1} parent=35 // pred_check
          %p327 = pneg %p95
        $region42: #{tpu_custom_call.1} parent=35 // pred_check_branch
          %329 = sbr.rel (%p327) target = $region44
        $region43: #{tpu_custom_call.1} parent=35 // pred_region
          %330 = dma.done %s323, 128
        $region44: #{tpu_custom_call.1} parent=35 // pred_fallthru
          _
        %s331 = sand.u32 %s32, 1
        %s332 = scalar_lea.sflag [#allocation6], %s331
        %s333 = sand.u32 %s110, 1
        %s334 = smul.addr %s333, 8
        %s335 = scalar_lea.vmem [#allocation7], %s334
        // Predicated region
        $region45: #{tpu_custom_call.1} parent=35 // pred_check
          %p336 = pneg %p123
        $region46: #{tpu_custom_call.1} parent=35 // pred_check_branch
          %338 = sbr.rel (%p336) target = $region48
        $region47: #{tpu_custom_call.1} parent=35 // pred_region
          %339 = dma.done %s332, 128
        $region48: #{tpu_custom_call.1} parent=35 // pred_fallthru
          _
        %s340 = sand.u32 %s138, 1
        %s341 = scalar_lea.sflag [#allocation9], %s340
        %s342 = sand.u32 %s138, 1
        %s343 = smul.addr %s342, 8
        %s344 = scalar_lea.vmem [#allocation8], %s343
        // Predicated region
        $region49: #{tpu_custom_call.1} parent=35 // pred_check
          %p345 = pneg %p151
        $region50: #{tpu_custom_call.1} parent=35 // pred_check_branch
          %347 = sbr.rel (%p345) target = $region52
        $region51: #{tpu_custom_call.1} parent=35 // pred_region
          %348 = dma.done %s341, 128
        $region52: #{tpu_custom_call.1} parent=35 // pred_fallthru
          _
        %s349 = sand.u32 %s54, 1
        %s350 = scalar_lea.sflag [#allocation3], %s349
        %s351 = sand.u32 %s54, 1
        %s352 = smul.addr %s351, 16
        %s353 = scalar_lea.vmem [#allocation2], %s352
        %p354 = pneg %p67
        %p355 = pneg %p64
        %s356 = sand.u32 %s32, 1
        %s357 = scalar_lea.sflag [#allocation6], %s356
        %s358 = sand.u32 %s82, 1
        %s359 = smul.addr %s358, 8
        %s360 = scalar_lea.vmem [#allocation5], %s359
        %p361 = pneg %p95
        %p362 = pneg %p92
        %s363 = sand.u32 %s32, 1
        %s364 = scalar_lea.sflag [#allocation6], %s363
        %s365 = sand.u32 %s110, 1
        %s366 = smul.addr %s365, 8
        %s367 = scalar_lea.vmem [#allocation7], %s366
        %p368 = pneg %p123
        %p369 = pneg %p120
        %s370 = sand.u32 %s138, 1
        %s371 = scalar_lea.sflag [#allocation9], %s370
        %s372 = sand.u32 %s138, 1
        %s373 = smul.addr %s372, 8
        %s374 = scalar_lea.vmem [#allocation8], %s373
        %p375 = pneg %p151
        %p376 = pneg %p148
        %p377 = pneg %p179
        %p378 = pneg %p176
        %s379 = sand.u32 %s166, 1
        %s380 = scalar_lea.sflag [#allocation4], %s379
        %s381 = sand.u32 %s166, 1
        %s382 = smul.addr %s381, 8
        %s383 = scalar_lea.vmem [#allocation10], %s382
        %p384 = pneg %p207
        %p385 = pneg %p204
        %s386 = sand.u32 %s194, 1
        %s387 = scalar_lea.sflag [#allocation12], %s386
        %s388 = sand.u32 %s194, 1
        %s389 = smul.addr %s388, 8
        %s390 = scalar_lea.vmem [#allocation11], %s389
        %s391 = smul.u32 2, %s37
        %v392 = vld [vmem:[%s317] sm:$0xff]
        %v393 = vld [vmem:[%s317 + $0x8] sm:$0xff]
        %v394 = vld [vmem:[%s326] sm:$0xff]
        %v395 = vld [vmem:[%s335] sm:$0xff]
        %v396 = vsub.f32 0.0, %v395
        %v397 = vmul.f32 %v396, 1.442695
        %v398 = vpow.pop %v397
        %v399 = vld [vmem:[%s344] sm:$0xff]
        %vm400 = vcmp.gt.f32.partialorder %v398, 0.3
        %v401 = vsel %vm400, 1, 0
        %v402 = vcvt.s32.f32 %v401
        %v403 = vmul.f32 %v399, %v402
        %vm404 = vcmp.gt.f32.partialorder %v403, 0.5
        %v405 = vsel %vm404, 1.0, 0.0
        %v406 = vmul.f32 %v405, %v398
        %v407 = vmul.f32 %v406, %v394
        %v408 = vlaneseq
        %v409 = vshrl.u32 %v408, 7
        %v410 = vlaneseq
        %v411 = vand.u32 %v410, 127
        %v412 = vmul.u32 %v409, 2
        %vm413 = vcmp.ge.s32.totalorder %v411, %v412
        %v414 = vadd.s32 %v412, 2
        %vm415 = vcmp.lt.s32.totalorder %v411, %v414
        %vm416 = vmand %vm413, %vm415
        %v417 = vsel %vm416, 1, 0
        %v418 = vcvt.s32.f32 %v417
        %vm419 = vcmask 64512
        %v421 = vsel %vm419, %v406, 0
        %423 = vmatprep.subr.mxu0 0.0
        %v424 = vand.u32 %v418, 4294901760
        %425 = vmatpush1.msra.mxu0 %v424
        %426 = vmatprep.subr.mxu0 0.0
        %427 = vmatpush1.msra.mxu0 0.0
        %428 = vmatprep.subr.mxu0 0.0
        %429 = vmatpush1.msra.mxu0 0.0
        %430 = vmatprep.subr.mxu0 0.0
        %431 = vmatpush1.msra.mxu0 0.0
        %432 = vmatprep.subr.mxu0 0.0
        %433 = vmatpush1.msra.mxu0 0.0
        %434 = vmatprep.subr.mxu0 0.0
        %435 = vmatpush1.msra.mxu0 0.0
        %436 = vmatprep.subr.mxu0 0.0
        %437 = vmatpush1.msra.mxu0 0.0
        %438 = vmatprep.subr.mxu0 0.0
        %439 = vmatpush1.msra.mxu0 0.0
        %440 = vmatprep.subr.mxu0 0.0
        %441 = vmatpush1.msra.mxu0 0.0
        %442 = vmatprep.subr.mxu0 0.0
        %443 = vmatpush1.msra.mxu0 0.0
        %444 = vmatprep.subr.mxu0 0.0
        %445 = vmatpush1.msra.mxu0 0.0
        %446 = vmatprep.subr.mxu0 0.0
        %447 = vmatpush1.msra.mxu0 0.0
        %448 = vmatprep.subr.mxu0 0.0
        %449 = vmatpush1.msra.mxu0 0.0
        %450 = vmatprep.subr.mxu0 0.0
        %451 = vmatpush1.msra.mxu0 0.0
        %452 = vmatprep.subr.mxu0 0.0
        %453 = vmatpush1.msra.mxu0 0.0
        %454 = vmatprep.subr.mxu0 0.0
        %455 = vmatpush1.msra.mxu0 0.0
        %456 = vmatprep.subr.mxu0 0.0
        %457 = vmatpush1.msra.mxu0 0.0
        %458 = vmatprep.subr.mxu0 0.0
        %459 = vmatpush1.msra.mxu0 0.0
        %460 = vmatprep.subr.mxu0 0.0
        %461 = vmatpush1.msra.mxu0 0.0
        %462 = vmatprep.subr.mxu0 0.0
        %463 = vmatpush1.msra.mxu0 0.0
        %464 = vmatprep.subr.mxu0 0.0
        %465 = vmatpush1.msra.mxu0 0.0
        %466 = vmatprep.subr.mxu0 0.0
        %467 = vmatpush1.msra.mxu0 0.0
        %468 = vmatprep.subr.mxu0 0.0
        %469 = vmatpush1.msra.mxu0 0.0
        %470 = vmatprep.subr.mxu0 0.0
        %471 = vmatpush1.msra.mxu0 0.0
        %472 = vmatprep.subr.mxu0 0.0
        %473 = vmatpush1.msra.mxu0 0.0
        %474 = vmatprep.subr.mxu0 0.0
        %475 = vmatpush1.msra.mxu0 0.0
        %476 = vmatprep.subr.mxu0 0.0
        %477 = vmatpush1.msra.mxu0 0.0
        %478 = vmatprep.subr.mxu0 0.0
        %479 = vmatpush1.msra.mxu0 0.0
        %480 = vmatprep.subr.mxu0 0.0
        %481 = vmatpush1.msra.mxu0 0.0
        %482 = vmatprep.subr.mxu0 0.0
        %483 = vmatpush1.msra.mxu0 0.0
        %484 = vmatprep.subr.mxu0 0.0
        %485 = vmatpush1.msra.mxu0 0.0
        %486 = vmatprep.subr.mxu0 0.0
        %487 = vmatpush1.msra.mxu0 0.0
        %488 = vmatprep.mubr.f32.mxu0 0.0
        %v489 = vand.u32 %v421, 4294901760
        %v490 = vsub.f32 %v421, %v489
        %v491 = vand.u32 %v490, 4294901760
        %v492 = vsub.f32 %v490, %v491
        %v493 = vand.u32 %v492, 4294901760
        %494 = vmatmul.mubr.f32.gmra.mrb[0].mxu0 %v493
        %v495 = vpop.f32.mrb[0].mxu0
        %v496 = vadd.f32 0.0, %v495
        %v497 = vpop.f32.mrb[0].mxu0
        %498 = vdwg.mxu0
        %499 = vmatprep.subr.mxu0 0.0
        %v500 = vand.u32 %v418, 4294901760
        %v501 = vsub.f32 %v418, %v500
        %v502 = vand.u32 %v501, 4294901760
        %v503 = vsub.f32 %v501, %v502
        %v504 = vand.u32 %v503, 4294901760
        %505 = vmatpush1.msra.mxu0 %v504
        %506 = vmatprep.subr.mxu0 0.0
        %507 = vmatpush1.msra.mxu0 0.0
        %508 = vmatprep.subr.mxu0 0.0
        %509 = vmatpush1.msra.mxu0 0.0
        %510 = vmatprep.subr.mxu0 0.0
        %511 = vmatpush1.msra.mxu0 0.0
        %512 = vmatprep.subr.mxu0 0.0
        %513 = vmatpush1.msra.mxu0 0.0
        %514 = vmatprep.subr.mxu0 0.0
        %515 = vmatpush1.msra.mxu0 0.0
        %516 = vmatprep.subr.mxu0 0.0
        %517 = vmatpush1.msra.mxu0 0.0
        %518 = vmatprep.subr.mxu0 0.0
        %519 = vmatpush1.msra.mxu0 0.0
        %520 = vmatprep.subr.mxu0 0.0
        %521 = vmatpush1.msra.mxu0 0.0
        %522 = vmatprep.subr.mxu0 0.0
        %523 = vmatpush1.msra.mxu0 0.0
        %524 = vmatprep.subr.mxu0 0.0
        %525 = vmatpush1.msra.mxu0 0.0
        %526 = vmatprep.subr.mxu0 0.0
        %527 = vmatpush1.msra.mxu0 0.0
        %528 = vmatprep.subr.mxu0 0.0
        %529 = vmatpush1.msra.mxu0 0.0
        %530 = vmatprep.subr.mxu0 0.0
        %531 = vmatpush1.msra.mxu0 0.0
        %532 = vmatprep.subr.mxu0 0.0
        %533 = vmatpush1.msra.mxu0 0.0
        %534 = vmatprep.subr.mxu0 0.0
        %535 = vmatpush1.msra.mxu0 0.0
        %536 = vmatprep.subr.mxu0 0.0
        %537 = vmatpush1.msra.mxu0 0.0
        %538 = vmatprep.subr.mxu0 0.0
        %539 = vmatpush1.msra.mxu0 0.0
        %540 = vmatprep.subr.mxu0 0.0
        %541 = vmatpush1.msra.mxu0 0.0
        %542 = vmatprep.subr.mxu0 0.0
        %543 = vmatpush1.msra.mxu0 0.0
        %544 = vmatprep.subr.mxu0 0.0
        %545 = vmatpush1.msra.mxu0 0.0
        %546 = vmatprep.subr.mxu0 0.0
        %547 = vmatpush1.msra.mxu0 0.0
        %548 = vmatprep.subr.mxu0 0.0
        %549 = vmatpush1.msra.mxu0 0.0
        %550 = vmatprep.subr.mxu0 0.0
        %551 = vmatpush1.msra.mxu0 0.0
        %552 = vmatprep.subr.mxu0 0.0
        %553 = vmatpush1.msra.mxu0 0.0
        %554 = vmatprep.subr.mxu0 0.0
        %555 = vmatpush1.msra.mxu0 0.0
        %556 = vmatprep.subr.mxu0 0.0
        %557 = vmatpush1.msra.mxu0 0.0
        %558 = vmatprep.subr.mxu0 0.0
        %559 = vmatpush1.msra.mxu0 0.0
        %560 = vmatprep.subr.mxu0 0.0
        %561 = vmatpush1.msra.mxu0 0.0
        %562 = vmatprep.subr.mxu0 0.0
        %563 = vmatpush1.msra.mxu0 0.0
        %564 = vmatprep.subr.mxu0 0.0
        %565 = vmatpush1.msra.mxu0 0.0
        %566 = vmatprep.subr.mxu0 0.0
        %567 = vmatpush1.msra.mxu0 0.0
        %568 = vmatprep.mubr.f32.mxu0 0.0
        %v569 = vand.u32 %v421, 4294901760
        %570 = vmatmul.mubr.f32.gmra.mrb[0].mxu0 %v569
        %v571 = vpop.f32.mrb[0].mxu0
        %v572 = vadd.f32 %v496, %v571
        %v573 = vpop.f32.mrb[0].mxu0
        %574 = vdwg.mxu0
        %575 = vmatprep.subr.mxu0 0.0
        %v576 = vand.u32 %v418, 4294901760
        %v577 = vsub.f32 %v418, %v576
        %578 = vmatpush1.msra.mxu0 %v577
        %579 = vmatprep.subr.mxu0 0.0
        %580 = vmatpush1.msra.mxu0 0.0
        %581 = vmatprep.subr.mxu0 0.0
        %582 = vmatpush1.msra.mxu0 0.0
        %583 = vmatprep.subr.mxu0 0.0
        %584 = vmatpush1.msra.mxu0 0.0
        %585 = vmatprep.subr.mxu0 0.0
        %586 = vmatpush1.msra.mxu0 0.0
        %587 = vmatprep.subr.mxu0 0.0
        %588 = vmatpush1.msra.mxu0 0.0
        %589 = vmatprep.subr.mxu0 0.0
        %590 = vmatpush1.msra.mxu0 0.0
        %591 = vmatprep.subr.mxu0 0.0
        %592 = vmatpush1.msra.mxu0 0.0
        %593 = vmatprep.subr.mxu0 0.0
        %594 = vmatpush1.msra.mxu0 0.0
        %595 = vmatprep.subr.mxu0 0.0
        %596 = vmatpush1.msra.mxu0 0.0
        %597 = vmatprep.subr.mxu0 0.0
        %598 = vmatpush1.msra.mxu0 0.0
        %599 = vmatprep.subr.mxu0 0.0
        %600 = vmatpush1.msra.mxu0 0.0
        %601 = vmatprep.subr.mxu0 0.0
        %602 = vmatpush1.msra.mxu0 0.0
        %603 = vmatprep.subr.mxu0 0.0
        %604 = vmatpush1.msra.mxu0 0.0
        %605 = vmatprep.subr.mxu0 0.0
        %606 = vmatpush1.msra.mxu0 0.0
        %607 = vmatprep.subr.mxu0 0.0
        %608 = vmatpush1.msra.mxu0 0.0
        %609 = vmatprep.subr.mxu0 0.0
        %610 = vmatpush1.msra.mxu0 0.0
        %611 = vmatprep.subr.mxu0 0.0
        %612 = vmatpush1.msra.mxu0 0.0
        %613 = vmatprep.subr.mxu0 0.0
        %614 = vmatpush1.msra.mxu0 0.0
        %615 = vmatprep.subr.mxu0 0.0
        %616 = vmatpush1.msra.mxu0 0.0
        %617 = vmatprep.subr.mxu0 0.0
        %618 = vmatpush1.msra.mxu0 0.0
        %619 = vmatprep.subr.mxu0 0.0
        %620 = vmatpush1.msra.mxu0 0.0
        %621 = vmatprep.subr.mxu0 0.0
        %622 = vmatpush1.msra.mxu0 0.0
        %623 = vmatprep.subr.mxu0 0.0
        %624 = vmatpush1.msra.mxu0 0.0
        %625 = vmatprep.subr.mxu0 0.0
        %626 = vmatpush1.msra.mxu0 0.0
        %627 = vmatprep.subr.mxu0 0.0
        %628 = vmatpush1.msra.mxu0 0.0
        %629 = vmatprep.subr.mxu0 0.0
        %630 = vmatpush1.msra.mxu0 0.0
        %631 = vmatprep.subr.mxu0 0.0
        %632 = vmatpush1.msra.mxu0 0.0
        %633 = vmatprep.subr.mxu0 0.0
        %634 = vmatpush1.msra.mxu0 0.0
        %635 = vmatprep.subr.mxu0 0.0
        %636 = vmatpush1.msra.mxu0 0.0
        %637 = vmatprep.subr.mxu0 0.0
        %638 = vmatpush1.msra.mxu0 0.0
        %639 = vmatprep.subr.mxu0 0.0
        %640 = vmatpush1.msra.mxu0 0.0
        %641 = vmatprep.mubr.f32.mxu0 0.0
        %v642 = vand.u32 %v421, 4294901760
        %v643 = vsub.f32 %v421, %v642
        %644 = vmatmul.mubr.f32.gmra.mrb[0].mxu0 %v643
        %v645 = vpop.f32.mrb[0].mxu0
        %v646 = vadd.f32 %v572, %v645
        %v647 = vpop.f32.mrb[0].mxu0
        %648 = vdwg.mxu0
        %649 = vmatprep.subr.mxu0 0.0
        %v650 = vand.u32 %v418, 4294901760
        %651 = vmatpush1.msra.mxu0 %v650
        %652 = vmatprep.subr.mxu0 0.0
        %653 = vmatpush1.msra.mxu0 0.0
        %654 = vmatprep.subr.mxu0 0.0
        %655 = vmatpush1.msra.mxu0 0.0
        %656 = vmatprep.subr.mxu0 0.0
        %657 = vmatpush1.msra.mxu0 0.0
        %658 = vmatprep.subr.mxu0 0.0
        %659 = vmatpush1.msra.mxu0 0.0
        %660 = vmatprep.subr.mxu0 0.0
        %661 = vmatpush1.msra.mxu0 0.0
        %662 = vmatprep.subr.mxu0 0.0
        %663 = vmatpush1.msra.mxu0 0.0
        %664 = vmatprep.subr.mxu0 0.0
        %665 = vmatpush1.msra.mxu0 0.0
        %666 = vmatprep.subr.mxu0 0.0
        %667 = vmatpush1.msra.mxu0 0.0
        %668 = vmatprep.subr.mxu0 0.0
        %669 = vmatpush1.msra.mxu0 0.0
        %670 = vmatprep.subr.mxu0 0.0
        %671 = vmatpush1.msra.mxu0 0.0
        %672 = vmatprep.subr.mxu0 0.0
        %673 = vmatpush1.msra.mxu0 0.0
        %674 = vmatprep.subr.mxu0 0.0
        %675 = vmatpush1.msra.mxu0 0.0
        %676 = vmatprep.subr.mxu0 0.0
        %677 = vmatpush1.msra.mxu0 0.0
        %678 = vmatprep.subr.mxu0 0.0
        %679 = vmatpush1.msra.mxu0 0.0
        %680 = vmatprep.subr.mxu0 0.0
        %681 = vmatpush1.msra.mxu0 0.0
        %682 = vmatprep.subr.mxu0 0.0
        %683 = vmatpush1.msra.mxu0 0.0
        %684 = vmatprep.subr.mxu0 0.0
        %685 = vmatpush1.msra.mxu0 0.0
        %686 = vmatprep.subr.mxu0 0.0
        %687 = vmatpush1.msra.mxu0 0.0
        %688 = vmatprep.subr.mxu0 0.0
        %689 = vmatpush1.msra.mxu0 0.0
        %690 = vmatprep.subr.mxu0 0.0
        %691 = vmatpush1.msra.mxu0 0.0
        %692 = vmatprep.subr.mxu0 0.0
        %693 = vmatpush1.msra.mxu0 0.0
        %694 = vmatprep.subr.mxu0 0.0
        %695 = vmatpush1.msra.mxu0 0.0
        %696 = vmatprep.subr.mxu0 0.0
        %697 = vmatpush1.msra.mxu0 0.0
        %698 = vmatprep.subr.mxu0 0.0
        %699 = vmatpush1.msra.mxu0 0.0
        %700 = vmatprep.subr.mxu0 0.0
        %701 = vmatpush1.msra.mxu0 0.0
        %702 = vmatprep.subr.mxu0 0.0
        %703 = vmatpush1.msra.mxu0 0.0
        %704 = vmatprep.subr.mxu0 0.0
        %705 = vmatpush1.msra.mxu0 0.0
        %706 = vmatprep.subr.mxu0 0.0
        %707 = vmatpush1.msra.mxu0 0.0
        %708 = vmatprep.subr.mxu0 0.0
        %709 = vmatpush1.msra.mxu0 0.0
        %710 = vmatprep.subr.mxu0 0.0
        %711 = vmatpush1.msra.mxu0 0.0
        %712 = vmatprep.subr.mxu0 0.0
        %713 = vmatpush1.msra.mxu0 0.0
        %714 = vmatprep.mubr.f32.mxu0 0.0
        %v715 = vand.u32 %v421, 4294901760
        %v716 = vsub.f32 %v421, %v715
        %v717 = vand.u32 %v716, 4294901760
        %718 = vmatmul.mubr.f32.gmra.mrb[0].mxu0 %v717
        %v719 = vpop.f32.mrb[0].mxu0
        %v720 = vadd.f32 %v646, %v719
        %v721 = vpop.f32.mrb[0].mxu0
        %722 = vdwg.mxu0
        %723 = vmatprep.subr.mxu0 0.0
        %v724 = vand.u32 %v418, 4294901760
        %v725 = vsub.f32 %v418, %v724
        %v726 = vand.u32 %v725, 4294901760
        %727 = vmatpush1.msra.mxu0 %v726
        %728 = vmatprep.subr.mxu0 0.0
        %729 = vmatpush1.msra.mxu0 0.0
        %730 = vmatprep.subr.mxu0 0.0
        %731 = vmatpush1.msra.mxu0 0.0
        %732 = vmatprep.subr.mxu0 0.0
        %733 = vmatpush1.msra.mxu0 0.0
        %734 = vmatprep.subr.mxu0 0.0
        %735 = vmatpush1.msra.mxu0 0.0
        %736 = vmatprep.subr.mxu0 0.0
        %737 = vmatpush1.msra.mxu0 0.0
        %738 = vmatprep.subr.mxu0 0.0
        %739 = vmatpush1.msra.mxu0 0.0
        %740 = vmatprep.subr.mxu0 0.0
        %741 = vmatpush1.msra.mxu0 0.0
        %742 = vmatprep.subr.mxu0 0.0
        %743 = vmatpush1.msra.mxu0 0.0
        %744 = vmatprep.subr.mxu0 0.0
        %745 = vmatpush1.msra.mxu0 0.0
        %746 = vmatprep.subr.mxu0 0.0
        %747 = vmatpush1.msra.mxu0 0.0
        %748 = vmatprep.subr.mxu0 0.0
        %749 = vmatpush1.msra.mxu0 0.0
        %750 = vmatprep.subr.mxu0 0.0
        %751 = vmatpush1.msra.mxu0 0.0
        %752 = vmatprep.subr.mxu0 0.0
        %753 = vmatpush1.msra.mxu0 0.0
        %754 = vmatprep.subr.mxu0 0.0
        %755 = vmatpush1.msra.mxu0 0.0
        %756 = vmatprep.subr.mxu0 0.0
        %757 = vmatpush1.msra.mxu0 0.0
        %758 = vmatprep.subr.mxu0 0.0
        %759 = vmatpush1.msra.mxu0 0.0
        %760 = vmatprep.subr.mxu0 0.0
        %761 = vmatpush1.msra.mxu0 0.0
        %762 = vmatprep.subr.mxu0 0.0
        %763 = vmatpush1.msra.mxu0 0.0
        %764 = vmatprep.subr.mxu0 0.0
        %765 = vmatpush1.msra.mxu0 0.0
        %766 = vmatprep.subr.mxu0 0.0
        %767 = vmatpush1.msra.mxu0 0.0
        %768 = vmatprep.subr.mxu0 0.0
        %769 = vmatpush1.msra.mxu0 0.0
        %770 = vmatprep.subr.mxu0 0.0
        %771 = vmatpush1.msra.mxu0 0.0
        %772 = vmatprep.subr.mxu0 0.0
        %773 = vmatpush1.msra.mxu0 0.0
        %774 = vmatprep.subr.mxu0 0.0
        %775 = vmatpush1.msra.mxu0 0.0
        %776 = vmatprep.subr.mxu0 0.0
        %777 = vmatpush1.msra.mxu0 0.0
        %778 = vmatprep.subr.mxu0 0.0
        %779 = vmatpush1.msra.mxu0 0.0
        %780 = vmatprep.subr.mxu0 0.0
        %781 = vmatpush1.msra.mxu0 0.0
        %782 = vmatprep.subr.mxu0 0.0
        %783 = vmatpush1.msra.mxu0 0.0
        %784 = vmatprep.subr.mxu0 0.0
        %785 = vmatpush1.msra.mxu0 0.0
        %786 = vmatprep.subr.mxu0 0.0
        %787 = vmatpush1.msra.mxu0 0.0
        %788 = vmatprep.subr.mxu0 0.0
        %789 = vmatpush1.msra.mxu0 0.0
        %790 = vmatprep.mubr.f32.mxu0 0.0
        %v791 = vand.u32 %v421, 4294901760
        %792 = vmatmul.mubr.f32.gmra.mrb[0].mxu0 %v791
        %v793 = vpop.f32.mrb[0].mxu0
        %v794 = vadd.f32 %v720, %v793
        %v795 = vpop.f32.mrb[0].mxu0
        %796 = vdwg.mxu0
        %797 = vmatprep.subr.mxu0 0.0
        %v798 = vand.u32 %v418, 4294901760
        %799 = vmatpush1.msra.mxu0 %v798
        %800 = vmatprep.subr.mxu0 0.0
        %801 = vmatpush1.msra.mxu0 0.0
        %802 = vmatprep.subr.mxu0 0.0
        %803 = vmatpush1.msra.mxu0 0.0
        %804 = vmatprep.subr.mxu0 0.0
        %805 = vmatpush1.msra.mxu0 0.0
        %806 = vmatprep.subr.mxu0 0.0
        %807 = vmatpush1.msra.mxu0 0.0
        %808 = vmatprep.subr.mxu0 0.0
        %809 = vmatpush1.msra.mxu0 0.0
        %810 = vmatprep.subr.mxu0 0.0
        %811 = vmatpush1.msra.mxu0 0.0
        %812 = vmatprep.subr.mxu0 0.0
        %813 = vmatpush1.msra.mxu0 0.0
        %814 = vmatprep.subr.mxu0 0.0
        %815 = vmatpush1.msra.mxu0 0.0
        %816 = vmatprep.subr.mxu0 0.0
        %817 = vmatpush1.msra.mxu0 0.0
        %818 = vmatprep.subr.mxu0 0.0
        %819 = vmatpush1.msra.mxu0 0.0
        %820 = vmatprep.subr.mxu0 0.0
        %821 = vmatpush1.msra.mxu0 0.0
        %822 = vmatprep.subr.mxu0 0.0
        %823 = vmatpush1.msra.mxu0 0.0
        %824 = vmatprep.subr.mxu0 0.0
        %825 = vmatpush1.msra.mxu0 0.0
        %826 = vmatprep.subr.mxu0 0.0
        %827 = vmatpush1.msra.mxu0 0.0
        %828 = vmatprep.subr.mxu0 0.0
        %829 = vmatpush1.msra.mxu0 0.0
        %830 = vmatprep.subr.mxu0 0.0
        %831 = vmatpush1.msra.mxu0 0.0
        %832 = vmatprep.subr.mxu0 0.0
        %833 = vmatpush1.msra.mxu0 0.0
        %834 = vmatprep.subr.mxu0 0.0
        %835 = vmatpush1.msra.mxu0 0.0
        %836 = vmatprep.subr.mxu0 0.0
        %837 = vmatpush1.msra.mxu0 0.0
        %838 = vmatprep.subr.mxu0 0.0
        %839 = vmatpush1.msra.mxu0 0.0
        %840 = vmatprep.subr.mxu0 0.0
        %841 = vmatpush1.msra.mxu0 0.0
        %842 = vmatprep.subr.mxu0 0.0
        %843 = vmatpush1.msra.mxu0 0.0
        %844 = vmatprep.subr.mxu0 0.0
        %845 = vmatpush1.msra.mxu0 0.0
        %846 = vmatprep.subr.mxu0 0.0
        %847 = vmatpush1.msra.mxu0 0.0
        %848 = vmatprep.subr.mxu0 0.0
        %849 = vmatpush1.msra.mxu0 0.0
        %850 = vmatprep.subr.mxu0 0.0
        %851 = vmatpush1.msra.mxu0 0.0
        %852 = vmatprep.subr.mxu0 0.0
        %853 = vmatpush1.msra.mxu0 0.0
        %854 = vmatprep.subr.mxu0 0.0
        %855 = vmatpush1.msra.mxu0 0.0
        %856 = vmatprep.subr.mxu0 0.0
        %857 = vmatpush1.msra.mxu0 0.0
        %858 = vmatprep.subr.mxu0 0.0
        %859 = vmatpush1.msra.mxu0 0.0
        %860 = vmatprep.subr.mxu0 0.0
        %861 = vmatpush1.msra.mxu0 0.0
        %862 = vmatprep.mubr.f32.mxu0 0.0
        %v863 = vand.u32 %v421, 4294901760
        %864 = vmatmul.mubr.f32.gmra.mrb[0].mxu0 %v863
        %v865 = vpop.f32.mrb[0].mxu0
        %v866 = vadd.f32 %v794, %v865
        %v867 = vpop.f32.mrb[0].mxu0
        %868 = vdwg.mxu0
        %v869 = vadd.s32 %v409, 8
        %v870 = vmul.u32 %v411, 2
        %vm871 = vcmp.ge.s32.totalorder %v409, %v870
        %vm872 = vcmp.ge.s32.totalorder %v869, %v870
        %v873 = vadd.s32 %v870, 2
        %vm874 = vcmp.lt.s32.totalorder %v409, %v873
        %vm875 = vcmp.lt.s32.totalorder %v869, %v873
        %vm876 = vmand %vm871, %vm874
        %vm877 = vmand %vm872, %vm875
        %v878 = vsel %vm876, 1, 0
        %v879 = vsel %vm877, 1, 0
        %v880 = vcvt.s32.f32 %v878
        %v881 = vcvt.s32.f32 %v879
        %v883 = vsel %vm419, %v880, 0
        %v886 = vsel %vm419, %v881, 0
        %888 = vmatprep.subr.mxu0 0.0
        %v889 = vand.u32 %v866, 4294901760
        %890 = vmatpush1.msra.mxu0 %v889
        %891 = vmatprep.subr.mxu0 0.0
        %892 = vmatpush1.msra.mxu0 0.0
        %893 = vmatprep.subr.mxu0 0.0
        %894 = vmatpush1.msra.mxu0 0.0
        %895 = vmatprep.subr.mxu0 0.0
        %896 = vmatpush1.msra.mxu0 0.0
        %897 = vmatprep.subr.mxu0 0.0
        %898 = vmatpush1.msra.mxu0 0.0
        %899 = vmatprep.subr.mxu0 0.0
        %900 = vmatpush1.msra.mxu0 0.0
        %901 = vmatprep.subr.mxu0 0.0
        %902 = vmatpush1.msra.mxu0 0.0
        %903 = vmatprep.subr.mxu0 0.0
        %904 = vmatpush1.msra.mxu0 0.0
        %905 = vmatprep.subr.mxu0 0.0
        %906 = vmatpush1.msra.mxu0 0.0
        %907 = vmatprep.subr.mxu0 0.0
        %908 = vmatpush1.msra.mxu0 0.0
        %909 = vmatprep.subr.mxu0 0.0
        %910 = vmatpush1.msra.mxu0 0.0
        %911 = vmatprep.subr.mxu0 0.0
        %912 = vmatpush1.msra.mxu0 0.0
        %913 = vmatprep.subr.mxu0 0.0
        %914 = vmatpush1.msra.mxu0 0.0
        %915 = vmatprep.subr.mxu0 0.0
        %916 = vmatpush1.msra.mxu0 0.0
        %917 = vmatprep.subr.mxu0 0.0
        %918 = vmatpush1.msra.mxu0 0.0
        %919 = vmatprep.subr.mxu0 0.0
        %920 = vmatpush1.msra.mxu0 0.0
        %921 = vmatprep.subr.mxu0 0.0
        %922 = vmatpush1.msra.mxu0 0.0
        %923 = vmatprep.subr.mxu0 0.0
        %924 = vmatpush1.msra.mxu0 0.0
        %925 = vmatprep.subr.mxu0 0.0
        %926 = vmatpush1.msra.mxu0 0.0
        %927 = vmatprep.subr.mxu0 0.0
        %928 = vmatpush1.msra.mxu0 0.0
        %929 = vmatprep.subr.mxu0 0.0
        %930 = vmatpush1.msra.mxu0 0.0
        %931 = vmatprep.subr.mxu0 0.0
        %932 = vmatpush1.msra.mxu0 0.0
        %933 = vmatprep.subr.mxu0 0.0
        %934 = vmatpush1.msra.mxu0 0.0
        %935 = vmatprep.subr.mxu0 0.0
        %936 = vmatpush1.msra.mxu0 0.0
        %937 = vmatprep.subr.mxu0 0.0
        %938 = vmatpush1.msra.mxu0 0.0
        %939 = vmatprep.subr.mxu0 0.0
        %940 = vmatpush1.msra.mxu0 0.0
        %941 = vmatprep.subr.mxu0 0.0
        %942 = vmatpush1.msra.mxu0 0.0
        %943 = vmatprep.subr.mxu0 0.0
        %944 = vmatpush1.msra.mxu0 0.0
        %945 = vmatprep.subr.mxu0 0.0
        %946 = vmatpush1.msra.mxu0 0.0
        %947 = vmatprep.subr.mxu0 0.0
        %948 = vmatpush1.msra.mxu0 0.0
        %949 = vmatprep.subr.mxu0 0.0
        %950 = vmatpush1.msra.mxu0 0.0
        %951 = vmatprep.subr.mxu0 0.0
        %952 = vmatpush1.msra.mxu0 0.0
        %953 = vmatprep.mubr.f32.mxu0 0.0
        %v954 = vand.u32 %v883, 4294901760
        %v955 = vsub.f32 %v883, %v954
        %v956 = vand.u32 %v955, 4294901760
        %v957 = vsub.f32 %v955, %v956
        %v958 = vand.u32 %v957, 4294901760
        %959 = vmatmul.mubr.f32.gmra.mrb[0].mxu0 %v958
        %v960 = vpop.f32.mrb[0].mxu0
        %v961 = vadd.f32 0.0, %v960
        %v962 = vpop.f32.mrb[0].mxu0
        %963 = vmatprep.mubr.f32.mxu0 0.0
        %v964 = vand.u32 %v886, 4294901760
        %v965 = vsub.f32 %v886, %v964
        %v966 = vand.u32 %v965, 4294901760
        %v967 = vsub.f32 %v965, %v966
        %v968 = vand.u32 %v967, 4294901760
        %969 = vmatmul.mubr.f32.gmra.mrb[0].mxu0 %v968
        %v970 = vpop.f32.mrb[0].mxu0
        %v971 = vadd.f32 0.0, %v970
        %v972 = vpop.f32.mrb[0].mxu0
        %973 = vdwg.mxu0
        %974 = vmatprep.subr.mxu0 0.0
        %v975 = vand.u32 %v866, 4294901760
        %v976 = vsub.f32 %v866, %v975
        %v977 = vand.u32 %v976, 4294901760
        %v978 = vsub.f32 %v976, %v977
        %v979 = vand.u32 %v978, 4294901760
        %980 = vmatpush1.msra.mxu0 %v979
        %981 = vmatprep.subr.mxu0 0.0
        %982 = vmatpush1.msra.mxu0 0.0
        %983 = vmatprep.subr.mxu0 0.0
        %984 = vmatpush1.msra.mxu0 0.0
        %985 = vmatprep.subr.mxu0 0.0
        %986 = vmatpush1.msra.mxu0 0.0
        %987 = vmatprep.subr.mxu0 0.0
        %988 = vmatpush1.msra.mxu0 0.0
        %989 = vmatprep.subr.mxu0 0.0
        %990 = vmatpush1.msra.mxu0 0.0
        %991 = vmatprep.subr.mxu0 0.0
        %992 = vmatpush1.msra.mxu0 0.0
        %993 = vmatprep.subr.mxu0 0.0
        %994 = vmatpush1.msra.mxu0 0.0
        %995 = vmatprep.subr.mxu0 0.0
        %996 = vmatpush1.msra.mxu0 0.0
        %997 = vmatprep.subr.mxu0 0.0
        %998 = vmatpush1.msra.mxu0 0.0
        %999 = vmatprep.subr.mxu0 0.0
        %1000 = vmatpush1.msra.mxu0 0.0
        %1001 = vmatprep.subr.mxu0 0.0
        %1002 = vmatpush1.msra.mxu0 0.0
        %1003 = vmatprep.subr.mxu0 0.0
        %1004 = vmatpush1.msra.mxu0 0.0
        %1005 = vmatprep.subr.mxu0 0.0
        %1006 = vmatpush1.msra.mxu0 0.0
        %1007 = vmatprep.subr.mxu0 0.0
        %1008 = vmatpush1.msra.mxu0 0.0
        %1009 = vmatprep.subr.mxu0 0.0
        %1010 = vmatpush1.msra.mxu0 0.0
        %1011 = vmatprep.subr.mxu0 0.0
        %1012 = vmatpush1.msra.mxu0 0.0
        %1013 = vmatprep.subr.mxu0 0.0
        %1014 = vmatpush1.msra.mxu0 0.0
        %1015 = vmatprep.subr.mxu0 0.0
        %1016 = vmatpush1.msra.mxu0 0.0
        %1017 = vmatprep.subr.mxu0 0.0
        %1018 = vmatpush1.msra.mxu0 0.0
        %1019 = vmatprep.subr.mxu0 0.0
        %1020 = vmatpush1.msra.mxu0 0.0
        %1021 = vmatprep.subr.mxu0 0.0
        %1022 = vmatpush1.msra.mxu0 0.0
        %1023 = vmatprep.subr.mxu0 0.0
        %1024 = vmatpush1.msra.mxu0 0.0
        %1025 = vmatprep.subr.mxu0 0.0
        %1026 = vmatpush1.msra.mxu0 0.0
        %1027 = vmatprep.subr.mxu0 0.0
        %1028 = vmatpush1.msra.mxu0 0.0
        %1029 = vmatprep.subr.mxu0 0.0
        %1030 = vmatpush1.msra.mxu0 0.0
        %1031 = vmatprep.subr.mxu0 0.0
        %1032 = vmatpush1.msra.mxu0 0.0
        %1033 = vmatprep.subr.mxu0 0.0
        %1034 = vmatpush1.msra.mxu0 0.0
        %1035 = vmatprep.subr.mxu0 0.0
        %1036 = vmatpush1.msra.mxu0 0.0
        %1037 = vmatprep.subr.mxu0 0.0
        %1038 = vmatpush1.msra.mxu0 0.0
        %1039 = vmatprep.subr.mxu0 0.0
        %1040 = vmatpush1.msra.mxu0 0.0
        %1041 = vmatprep.subr.mxu0 0.0
        %1042 = vmatpush1.msra.mxu0 0.0
        %1043 = vmatprep.mubr.f32.mxu0 0.0
        %v1044 = vand.u32 %v883, 4294901760
        %1045 = vmatmul.mubr.f32.gmra.mrb[0].mxu0 %v1044
        %v1046 = vpop.f32.mrb[0].mxu0
        %v1047 = vadd.f32 %v961, %v1046
        %v1048 = vpop.f32.mrb[0].mxu0
        %1049 = vmatprep.mubr.f32.mxu0 0.0
        %v1050 = vand.u32 %v886, 4294901760
        %1051 = vmatmul.mubr.f32.gmra.mrb[0].mxu0 %v1050
        %v1052 = vpop.f32.mrb[0].mxu0
        %v1053 = vadd.f32 %v971, %v1052
        %v1054 = vpop.f32.mrb[0].mxu0
        %1055 = vdwg.mxu0
        %1056 = vmatprep.subr.mxu0 0.0
        %v1057 = vand.u32 %v866, 4294901760
        %v1058 = vsub.f32 %v866, %v1057
        %1059 = vmatpush1.msra.mxu0 %v1058
        %1060 = vmatprep.subr.mxu0 0.0
        %1061 = vmatpush1.msra.mxu0 0.0
        %1062 = vmatprep.subr.mxu0 0.0
        %1063 = vmatpush1.msra.mxu0 0.0
        %1064 = vmatprep.subr.mxu0 0.0
        %1065 = vmatpush1.msra.mxu0 0.0
        %1066 = vmatprep.subr.mxu0 0.0
        %1067 = vmatpush1.msra.mxu0 0.0
        %1068 = vmatprep.subr.mxu0 0.0
        %1069 = vmatpush1.msra.mxu0 0.0
        %1070 = vmatprep.subr.mxu0 0.0
        %1071 = vmatpush1.msra.mxu0 0.0
        %1072 = vmatprep.subr.mxu0 0.0
        %1073 = vmatpush1.msra.mxu0 0.0
        %1074 = vmatprep.subr.mxu0 0.0
        %1075 = vmatpush1.msra.mxu0 0.0
        %1076 = vmatprep.subr.mxu0 0.0
        %1077 = vmatpush1.msra.mxu0 0.0
        %1078 = vmatprep.subr.mxu0 0.0
        %1079 = vmatpush1.msra.mxu0 0.0
        %1080 = vmatprep.subr.mxu0 0.0
        %1081 = vmatpush1.msra.mxu0 0.0
        %1082 = vmatprep.subr.mxu0 0.0
        %1083 = vmatpush1.msra.mxu0 0.0
        %1084 = vmatprep.subr.mxu0 0.0
        %1085 = vmatpush1.msra.mxu0 0.0
        %1086 = vmatprep.subr.mxu0 0.0
        %1087 = vmatpush1.msra.mxu0 0.0
        %1088 = vmatprep.subr.mxu0 0.0
        %1089 = vmatpush1.msra.mxu0 0.0
        %1090 = vmatprep.subr.mxu0 0.0
        %1091 = vmatpush1.msra.mxu0 0.0
        %1092 = vmatprep.subr.mxu0 0.0
        %1093 = vmatpush1.msra.mxu0 0.0
        %1094 = vmatprep.subr.mxu0 0.0
        %1095 = vmatpush1.msra.mxu0 0.0
        %1096 = vmatprep.subr.mxu0 0.0
        %1097 = vmatpush1.msra.mxu0 0.0
        %1098 = vmatprep.subr.mxu0 0.0
        %1099 = vmatpush1.msra.mxu0 0.0
        %1100 = vmatprep.subr.mxu0 0.0
        %1101 = vmatpush1.msra.mxu0 0.0
        %1102 = vmatprep.subr.mxu0 0.0
        %1103 = vmatpush1.msra.mxu0 0.0
        %1104 = vmatprep.subr.mxu0 0.0
        %1105 = vmatpush1.msra.mxu0 0.0
        %1106 = vmatprep.subr.mxu0 0.0
        %1107 = vmatpush1.msra.mxu0 0.0
        %1108 = vmatprep.subr.mxu0 0.0
        %1109 = vmatpush1.msra.mxu0 0.0
        %1110 = vmatprep.subr.mxu0 0.0
        %1111 = vmatpush1.msra.mxu0 0.0
        %1112 = vmatprep.subr.mxu0 0.0
        %1113 = vmatpush1.msra.mxu0 0.0
        %1114 = vmatprep.subr.mxu0 0.0
        %1115 = vmatpush1.msra.mxu0 0.0
        %1116 = vmatprep.subr.mxu0 0.0
        %1117 = vmatpush1.msra.mxu0 0.0
        %1118 = vmatprep.subr.mxu0 0.0
        %1119 = vmatpush1.msra.mxu0 0.0
        %1120 = vmatprep.subr.mxu0 0.0
        %1121 = vmatpush1.msra.mxu0 0.0
        %1122 = vmatprep.mubr.f32.mxu0 0.0
        %v1123 = vand.u32 %v883, 4294901760
        %v1124 = vsub.f32 %v883, %v1123
        %1125 = vmatmul.mubr.f32.gmra.mrb[0].mxu0 %v1124
        %v1126 = vpop.f32.mrb[0].mxu0
        %v1127 = vadd.f32 %v1047, %v1126
        %v1128 = vpop.f32.mrb[0].mxu0
        %1129 = vmatprep.mubr.f32.mxu0 0.0
        %v1130 = vand.u32 %v886, 4294901760
        %v1131 = vsub.f32 %v886, %v1130
        %1132 = vmatmul.mubr.f32.gmra.mrb[0].mxu0 %v1131
        %v1133 = vpop.f32.mrb[0].mxu0
        %v1134 = vadd.f32 %v1053, %v1133
        %v1135 = vpop.f32.mrb[0].mxu0
        %1136 = vdwg.mxu0
        %1137 = vmatprep.subr.mxu0 0.0
        %v1138 = vand.u32 %v866, 4294901760
        %1139 = vmatpush1.msra.mxu0 %v1138
        %1140 = vmatprep.subr.mxu0 0.0
        %1141 = vmatpush1.msra.mxu0 0.0
        %1142 = vmatprep.subr.mxu0 0.0
        %1143 = vmatpush1.msra.mxu0 0.0
        %1144 = vmatprep.subr.mxu0 0.0
        %1145 = vmatpush1.msra.mxu0 0.0
        %1146 = vmatprep.subr.mxu0 0.0
        %1147 = vmatpush1.msra.mxu0 0.0
        %1148 = vmatprep.subr.mxu0 0.0
        %1149 = vmatpush1.msra.mxu0 0.0
        %1150 = vmatprep.subr.mxu0 0.0
        %1151 = vmatpush1.msra.mxu0 0.0
        %1152 = vmatprep.subr.mxu0 0.0
        %1153 = vmatpush1.msra.mxu0 0.0
        %1154 = vmatprep.subr.mxu0 0.0
        %1155 = vmatpush1.msra.mxu0 0.0
        %1156 = vmatprep.subr.mxu0 0.0
        %1157 = vmatpush1.msra.mxu0 0.0
        %1158 = vmatprep.subr.mxu0 0.0
        %1159 = vmatpush1.msra.mxu0 0.0
        %1160 = vmatprep.subr.mxu0 0.0
        %1161 = vmatpush1.msra.mxu0 0.0
        %1162 = vmatprep.subr.mxu0 0.0
        %1163 = vmatpush1.msra.mxu0 0.0
        %1164 = vmatprep.subr.mxu0 0.0
        %1165 = vmatpush1.msra.mxu0 0.0
        %1166 = vmatprep.subr.mxu0 0.0
        %1167 = vmatpush1.msra.mxu0 0.0
        %1168 = vmatprep.subr.mxu0 0.0
        %1169 = vmatpush1.msra.mxu0 0.0
        %1170 = vmatprep.subr.mxu0 0.0
        %1171 = vmatpush1.msra.mxu0 0.0
        %1172 = vmatprep.subr.mxu0 0.0
        %1173 = vmatpush1.msra.mxu0 0.0
        %1174 = vmatprep.subr.mxu0 0.0
        %1175 = vmatpush1.msra.mxu0 0.0
        %1176 = vmatprep.subr.mxu0 0.0
        %1177 = vmatpush1.msra.mxu0 0.0
        %1178 = vmatprep.subr.mxu0 0.0
        %1179 = vmatpush1.msra.mxu0 0.0
        %1180 = vmatprep.subr.mxu0 0.0
        %1181 = vmatpush1.msra.mxu0 0.0
        %1182 = vmatprep.subr.mxu0 0.0
        %1183 = vmatpush1.msra.mxu0 0.0
        %1184 = vmatprep.subr.mxu0 0.0
        %1185 = vmatpush1.msra.mxu0 0.0
        %1186 = vmatprep.subr.mxu0 0.0
        %1187 = vmatpush1.msra.mxu0 0.0
        %1188 = vmatprep.subr.mxu0 0.0
        %1189 = vmatpush1.msra.mxu0 0.0
        %1190 = vmatprep.subr.mxu0 0.0
        %1191 = vmatpush1.msra.mxu0 0.0
        %1192 = vmatprep.subr.mxu0 0.0
        %1193 = vmatpush1.msra.mxu0 0.0
        %1194 = vmatprep.subr.mxu0 0.0
        %1195 = vmatpush1.msra.mxu0 0.0
        %1196 = vmatprep.subr.mxu0 0.0
        %1197 = vmatpush1.msra.mxu0 0.0
        %1198 = vmatprep.subr.mxu0 0.0
        %1199 = vmatpush1.msra.mxu0 0.0
        %1200 = vmatprep.subr.mxu0 0.0
        %1201 = vmatpush1.msra.mxu0 0.0
        %1202 = vmatprep.mubr.f32.mxu0 0.0
        %v1203 = vand.u32 %v883, 4294901760
        %v1204 = vsub.f32 %v883, %v1203
        %v1205 = vand.u32 %v1204, 4294901760
        %1206 = vmatmul.mubr.f32.gmra.mrb[0].mxu0 %v1205
        %v1207 = vpop.f32.mrb[0].mxu0
        %v1208 = vadd.f32 %v1127, %v1207
        %v1209 = vpop.f32.mrb[0].mxu0
        %1210 = vmatprep.mubr.f32.mxu0 0.0
        %v1211 = vand.u32 %v886, 4294901760
        %v1212 = vsub.f32 %v886, %v1211
        %v1213 = vand.u32 %v1212, 4294901760
        %1214 = vmatmul.mubr.f32.gmra.mrb[0].mxu0 %v1213
        %v1215 = vpop.f32.mrb[0].mxu0
        %v1216 = vadd.f32 %v1134, %v1215
        %v1217 = vpop.f32.mrb[0].mxu0
        %1218 = vdwg.mxu0
        %1219 = vmatprep.subr.mxu0 0.0
        %v1220 = vand.u32 %v866, 4294901760
        %v1221 = vsub.f32 %v866, %v1220
        %v1222 = vand.u32 %v1221, 4294901760
        %1223 = vmatpush1.msra.mxu0 %v1222
        %1224 = vmatprep.subr.mxu0 0.0
        %1225 = vmatpush1.msra.mxu0 0.0
        %1226 = vmatprep.subr.mxu0 0.0
        %1227 = vmatpush1.msra.mxu0 0.0
        %1228 = vmatprep.subr.mxu0 0.0
        %1229 = vmatpush1.msra.mxu0 0.0
        %1230 = vmatprep.subr.mxu0 0.0
        %1231 = vmatpush1.msra.mxu0 0.0
        %1232 = vmatprep.subr.mxu0 0.0
        %1233 = vmatpush1.msra.mxu0 0.0
        %1234 = vmatprep.subr.mxu0 0.0
        %1235 = vmatpush1.msra.mxu0 0.0
        %1236 = vmatprep.subr.mxu0 0.0
        %1237 = vmatpush1.msra.mxu0 0.0
        %1238 = vmatprep.subr.mxu0 0.0
        %1239 = vmatpush1.msra.mxu0 0.0
        %1240 = vmatprep.subr.mxu0 0.0
        %1241 = vmatpush1.msra.mxu0 0.0
        %1242 = vmatprep.subr.mxu0 0.0
        %1243 = vmatpush1.msra.mxu0 0.0
        %1244 = vmatprep.subr.mxu0 0.0
        %1245 = vmatpush1.msra.mxu0 0.0
        %1246 = vmatprep.subr.mxu0 0.0
        %1247 = vmatpush1.msra.mxu0 0.0
        %1248 = vmatprep.subr.mxu0 0.0
        %1249 = vmatpush1.msra.mxu0 0.0
        %1250 = vmatprep.subr.mxu0 0.0
        %1251 = vmatpush1.msra.mxu0 0.0
        %1252 = vmatprep.subr.mxu0 0.0
        %1253 = vmatpush1.msra.mxu0 0.0
        %1254 = vmatprep.subr.mxu0 0.0
        %1255 = vmatpush1.msra.mxu0 0.0
        %1256 = vmatprep.subr.mxu0 0.0
        %1257 = vmatpush1.msra.mxu0 0.0
        %1258 = vmatprep.subr.mxu0 0.0
        %1259 = vmatpush1.msra.mxu0 0.0
        %1260 = vmatprep.subr.mxu0 0.0
        %1261 = vmatpush1.msra.mxu0 0.0
        %1262 = vmatprep.subr.mxu0 0.0
        %1263 = vmatpush1.msra.mxu0 0.0
        %1264 = vmatprep.subr.mxu0 0.0
        %1265 = vmatpush1.msra.mxu0 0.0
        %1266 = vmatprep.subr.mxu0 0.0
        %1267 = vmatpush1.msra.mxu0 0.0
        %1268 = vmatprep.subr.mxu0 0.0
        %1269 = vmatpush1.msra.mxu0 0.0
        %1270 = vmatprep.subr.mxu0 0.0
        %1271 = vmatpush1.msra.mxu0 0.0
        %1272 = vmatprep.subr.mxu0 0.0
        %1273 = vmatpush1.msra.mxu0 0.0
        %1274 = vmatprep.subr.mxu0 0.0
        %1275 = vmatpush1.msra.mxu0 0.0
        %1276 = vmatprep.subr.mxu0 0.0
        %1277 = vmatpush1.msra.mxu0 0.0
        %1278 = vmatprep.subr.mxu0 0.0
        %1279 = vmatpush1.msra.mxu0 0.0
        %1280 = vmatprep.subr.mxu0 0.0
        %1281 = vmatpush1.msra.mxu0 0.0
        %1282 = vmatprep.subr.mxu0 0.0
        %1283 = vmatpush1.msra.mxu0 0.0
        %1284 = vmatprep.subr.mxu0 0.0
        %1285 = vmatpush1.msra.mxu0 0.0
        %1286 = vmatprep.mubr.f32.mxu0 0.0
        %v1287 = vand.u32 %v883, 4294901760
        %1288 = vmatmul.mubr.f32.gmra.mrb[0].mxu0 %v1287
        %v1289 = vpop.f32.mrb[0].mxu0
        %v1290 = vadd.f32 %v1208, %v1289
        %v1291 = vpop.f32.mrb[0].mxu0
        %1292 = vmatprep.mubr.f32.mxu0 0.0
        %v1293 = vand.u32 %v886, 4294901760
        %1294 = vmatmul.mubr.f32.gmra.mrb[0].mxu0 %v1293
        %v1295 = vpop.f32.mrb[0].mxu0
        %v1296 = vadd.f32 %v1216, %v1295
        %v1297 = vpop.f32.mrb[0].mxu0
        %1298 = vdwg.mxu0
        %1299 = vmatprep.subr.mxu0 0.0
        %v1300 = vand.u32 %v866, 4294901760
        %1301 = vmatpush1.msra.mxu0 %v1300
        %1302 = vmatprep.subr.mxu0 0.0
        %1303 = vmatpush1.msra.mxu0 0.0
        %1304 = vmatprep.subr.mxu0 0.0
        %1305 = vmatpush1.msra.mxu0 0.0
        %1306 = vmatprep.subr.mxu0 0.0
        %1307 = vmatpush1.msra.mxu0 0.0
        %1308 = vmatprep.subr.mxu0 0.0
        %1309 = vmatpush1.msra.mxu0 0.0
        %1310 = vmatprep.subr.mxu0 0.0
        %1311 = vmatpush1.msra.mxu0 0.0
        %1312 = vmatprep.subr.mxu0 0.0
        %1313 = vmatpush1.msra.mxu0 0.0
        %1314 = vmatprep.subr.mxu0 0.0
        %1315 = vmatpush1.msra.mxu0 0.0
        %1316 = vmatprep.subr.mxu0 0.0
        %1317 = vmatpush1.msra.mxu0 0.0
        %1318 = vmatprep.subr.mxu0 0.0
        %1319 = vmatpush1.msra.mxu0 0.0
        %1320 = vmatprep.subr.mxu0 0.0
        %1321 = vmatpush1.msra.mxu0 0.0
        %1322 = vmatprep.subr.mxu0 0.0
        %1323 = vmatpush1.msra.mxu0 0.0
        %1324 = vmatprep.subr.mxu0 0.0
        %1325 = vmatpush1.msra.mxu0 0.0
        %1326 = vmatprep.subr.mxu0 0.0
        %1327 = vmatpush1.msra.mxu0 0.0
        %1328 = vmatprep.subr.mxu0 0.0
        %1329 = vmatpush1.msra.mxu0 0.0
        %1330 = vmatprep.subr.mxu0 0.0
        %1331 = vmatpush1.msra.mxu0 0.0
        %1332 = vmatprep.subr.mxu0 0.0
        %1333 = vmatpush1.msra.mxu0 0.0
        %1334 = vmatprep.subr.mxu0 0.0
        %1335 = vmatpush1.msra.mxu0 0.0
        %1336 = vmatprep.subr.mxu0 0.0
        %1337 = vmatpush1.msra.mxu0 0.0
        %1338 = vmatprep.subr.mxu0 0.0
        %1339 = vmatpush1.msra.mxu0 0.0
        %1340 = vmatprep.subr.mxu0 0.0
        %1341 = vmatpush1.msra.mxu0 0.0
        %1342 = vmatprep.subr.mxu0 0.0
        %1343 = vmatpush1.msra.mxu0 0.0
        %1344 = vmatprep.subr.mxu0 0.0
        %1345 = vmatpush1.msra.mxu0 0.0
        %1346 = vmatprep.subr.mxu0 0.0
        %1347 = vmatpush1.msra.mxu0 0.0
        %1348 = vmatprep.subr.mxu0 0.0
        %1349 = vmatpush1.msra.mxu0 0.0
        %1350 = vmatprep.subr.mxu0 0.0
        %1351 = vmatpush1.msra.mxu0 0.0
        %1352 = vmatprep.subr.mxu0 0.0
        %1353 = vmatpush1.msra.mxu0 0.0
        %1354 = vmatprep.subr.mxu0 0.0
        %1355 = vmatpush1.msra.mxu0 0.0
        %1356 = vmatprep.subr.mxu0 0.0
        %1357 = vmatpush1.msra.mxu0 0.0
        %1358 = vmatprep.subr.mxu0 0.0
        %1359 = vmatpush1.msra.mxu0 0.0
        %1360 = vmatprep.subr.mxu0 0.0
        %1361 = vmatpush1.msra.mxu0 0.0
        %1362 = vmatprep.subr.mxu0 0.0
        %1363 = vmatpush1.msra.mxu0 0.0
        %1364 = vmatprep.mubr.f32.mxu0 0.0
        %v1365 = vand.u32 %v883, 4294901760
        %1366 = vmatmul.mubr.f32.gmra.mrb[0].mxu0 %v1365
        %v1367 = vpop.f32.mrb[0].mxu0
        %v1368 = vadd.f32 %v1290, %v1367
        %v1369 = vpop.f32.mrb[0].mxu0
        %1370 = vmatprep.mubr.f32.mxu0 0.0
        %v1371 = vand.u32 %v886, 4294901760
        %1372 = vmatmul.mubr.f32.gmra.mrb[0].mxu0 %v1371
        %v1373 = vpop.f32.mrb[0].mxu0
        %v1374 = vadd.f32 %v1296, %v1373
        %v1375 = vpop.f32.mrb[0].mxu0
        %1376 = vdwg.mxu0
        %v1378 = vsel %vm419, %v407, 0
        %1380 = vmatprep.subr.mxu0 0.0
        %v1381 = vand.u32 %v418, 4294901760
        %1382 = vmatpush1.msra.mxu0 %v1381
        %1383 = vmatprep.subr.mxu0 0.0
        %1384 = vmatpush1.msra.mxu0 0.0
        %1385 = vmatprep.subr.mxu0 0.0
        %1386 = vmatpush1.msra.mxu0 0.0
        %1387 = vmatprep.subr.mxu0 0.0
        %1388 = vmatpush1.msra.mxu0 0.0
        %1389 = vmatprep.subr.mxu0 0.0
        %1390 = vmatpush1.msra.mxu0 0.0
        %1391 = vmatprep.subr.mxu0 0.0
        %1392 = vmatpush1.msra.mxu0 0.0
        %1393 = vmatprep.subr.mxu0 0.0
        %1394 = vmatpush1.msra.mxu0 0.0
        %1395 = vmatprep.subr.mxu0 0.0
        %1396 = vmatpush1.msra.mxu0 0.0
        %1397 = vmatprep.subr.mxu0 0.0
        %1398 = vmatpush1.msra.mxu0 0.0
        %1399 = vmatprep.subr.mxu0 0.0
        %1400 = vmatpush1.msra.mxu0 0.0
        %1401 = vmatprep.subr.mxu0 0.0
        %1402 = vmatpush1.msra.mxu0 0.0
        %1403 = vmatprep.subr.mxu0 0.0
        %1404 = vmatpush1.msra.mxu0 0.0
        %1405 = vmatprep.subr.mxu0 0.0
        %1406 = vmatpush1.msra.mxu0 0.0
        %1407 = vmatprep.subr.mxu0 0.0
        %1408 = vmatpush1.msra.mxu0 0.0
        %1409 = vmatprep.subr.mxu0 0.0
        %1410 = vmatpush1.msra.mxu0 0.0
        %1411 = vmatprep.subr.mxu0 0.0
        %1412 = vmatpush1.msra.mxu0 0.0
        %1413 = vmatprep.subr.mxu0 0.0
        %1414 = vmatpush1.msra.mxu0 0.0
        %1415 = vmatprep.subr.mxu0 0.0
        %1416 = vmatpush1.msra.mxu0 0.0
        %1417 = vmatprep.subr.mxu0 0.0
        %1418 = vmatpush1.msra.mxu0 0.0
        %1419 = vmatprep.subr.mxu0 0.0
        %1420 = vmatpush1.msra.mxu0 0.0
        %1421 = vmatprep.subr.mxu0 0.0
        %1422 = vmatpush1.msra.mxu0 0.0
        %1423 = vmatprep.subr.mxu0 0.0
        %1424 = vmatpush1.msra.mxu0 0.0
        %1425 = vmatprep.subr.mxu0 0.0
        %1426 = vmatpush1.msra.mxu0 0.0
        %1427 = vmatprep.subr.mxu0 0.0
        %1428 = vmatpush1.msra.mxu0 0.0
        %1429 = vmatprep.subr.mxu0 0.0
        %1430 = vmatpush1.msra.mxu0 0.0
        %1431 = vmatprep.subr.mxu0 0.0
        %1432 = vmatpush1.msra.mxu0 0.0
        %1433 = vmatprep.subr.mxu0 0.0
        %1434 = vmatpush1.msra.mxu0 0.0
        %1435 = vmatprep.subr.mxu0 0.0
        %1436 = vmatpush1.msra.mxu0 0.0
        %1437 = vmatprep.subr.mxu0 0.0
        %1438 = vmatpush1.msra.mxu0 0.0
        %1439 = vmatprep.subr.mxu0 0.0
        %1440 = vmatpush1.msra.mxu0 0.0
        %1441 = vmatprep.subr.mxu0 0.0
        %1442 = vmatpush1.msra.mxu0 0.0
        %1443 = vmatprep.subr.mxu0 0.0
        %1444 = vmatpush1.msra.mxu0 0.0
        %1445 = vmatprep.mubr.f32.mxu0 0.0
        %v1446 = vand.u32 %v1378, 4294901760
        %v1447 = vsub.f32 %v1378, %v1446
        %v1448 = vand.u32 %v1447, 4294901760
        %v1449 = vsub.f32 %v1447, %v1448
        %v1450 = vand.u32 %v1449, 4294901760
        %1451 = vmatmul.mubr.f32.gmra.mrb[0].mxu0 %v1450
        %v1452 = vpop.f32.mrb[0].mxu0
        %v1453 = vadd.f32 0.0, %v1452
        %v1454 = vpop.f32.mrb[0].mxu0
        %1455 = vdwg.mxu0
        %1456 = vmatprep.subr.mxu0 0.0
        %v1457 = vand.u32 %v418, 4294901760
        %v1458 = vsub.f32 %v418, %v1457
        %v1459 = vand.u32 %v1458, 4294901760
        %v1460 = vsub.f32 %v1458, %v1459
        %v1461 = vand.u32 %v1460, 4294901760
        %1462 = vmatpush1.msra.mxu0 %v1461
        %1463 = vmatprep.subr.mxu0 0.0
        %1464 = vmatpush1.msra.mxu0 0.0
        %1465 = vmatprep.subr.mxu0 0.0
        %1466 = vmatpush1.msra.mxu0 0.0
        %1467 = vmatprep.subr.mxu0 0.0
        %1468 = vmatpush1.msra.mxu0 0.0
        %1469 = vmatprep.subr.mxu0 0.0
        %1470 = vmatpush1.msra.mxu0 0.0
        %1471 = vmatprep.subr.mxu0 0.0
        %1472 = vmatpush1.msra.mxu0 0.0
        %1473 = vmatprep.subr.mxu0 0.0
        %1474 = vmatpush1.msra.mxu0 0.0
        %1475 = vmatprep.subr.mxu0 0.0
        %1476 = vmatpush1.msra.mxu0 0.0
        %1477 = vmatprep.subr.mxu0 0.0
        %1478 = vmatpush1.msra.mxu0 0.0
        %1479 = vmatprep.subr.mxu0 0.0
        %1480 = vmatpush1.msra.mxu0 0.0
        %1481 = vmatprep.subr.mxu0 0.0
        %1482 = vmatpush1.msra.mxu0 0.0
        %1483 = vmatprep.subr.mxu0 0.0
        %1484 = vmatpush1.msra.mxu0 0.0
        %1485 = vmatprep.subr.mxu0 0.0
        %1486 = vmatpush1.msra.mxu0 0.0
        %1487 = vmatprep.subr.mxu0 0.0
        %1488 = vmatpush1.msra.mxu0 0.0
        %1489 = vmatprep.subr.mxu0 0.0
        %1490 = vmatpush1.msra.mxu0 0.0
        %1491 = vmatprep.subr.mxu0 0.0
        %1492 = vmatpush1.msra.mxu0 0.0
        %1493 = vmatprep.subr.mxu0 0.0
        %1494 = vmatpush1.msra.mxu0 0.0
        %1495 = vmatprep.subr.mxu0 0.0
        %1496 = vmatpush1.msra.mxu0 0.0
        %1497 = vmatprep.subr.mxu0 0.0
        %1498 = vmatpush1.msra.mxu0 0.0
        %1499 = vmatprep.subr.mxu0 0.0
        %1500 = vmatpush1.msra.mxu0 0.0
        %1501 = vmatprep.subr.mxu0 0.0
        %1502 = vmatpush1.msra.mxu0 0.0
        %1503 = vmatprep.subr.mxu0 0.0
        %1504 = vmatpush1.msra.mxu0 0.0
        %1505 = vmatprep.subr.mxu0 0.0
        %1506 = vmatpush1.msra.mxu0 0.0
        %1507 = vmatprep.subr.mxu0 0.0
        %1508 = vmatpush1.msra.mxu0 0.0
        %1509 = vmatprep.subr.mxu0 0.0
        %1510 = vmatpush1.msra.mxu0 0.0
        %1511 = vmatprep.subr.mxu0 0.0
        %1512 = vmatpush1.msra.mxu0 0.0
        %1513 = vmatprep.subr.mxu0 0.0
        %1514 = vmatpush1.msra.mxu0 0.0
        %1515 = vmatprep.subr.mxu0 0.0
        %1516 = vmatpush1.msra.mxu0 0.0
        %1517 = vmatprep.subr.mxu0 0.0
        %1518 = vmatpush1.msra.mxu0 0.0
        %1519 = vmatprep.subr.mxu0 0.0
        %1520 = vmatpush1.msra.mxu0 0.0
        %1521 = vmatprep.subr.mxu0 0.0
        %1522 = vmatpush1.msra.mxu0 0.0
        %1523 = vmatprep.subr.mxu0 0.0
        %1524 = vmatpush1.msra.mxu0 0.0
        %1525 = vmatprep.mubr.f32.mxu0 0.0
        %v1526 = vand.u32 %v1378, 4294901760
        %1527 = vmatmul.mubr.f32.gmra.mrb[0].mxu0 %v1526
        %v1528 = vpop.f32.mrb[0].mxu0
        %v1529 = vadd.f32 %v1453, %v1528
        %v1530 = vpop.f32.mrb[0].mxu0
        %1531 = vdwg.mxu0
        %1532 = vmatprep.subr.mxu0 0.0
        %v1533 = vand.u32 %v418, 4294901760
        %v1534 = vsub.f32 %v418, %v1533
        %1535 = vmatpush1.msra.mxu0 %v1534
        %1536 = vmatprep.subr.mxu0 0.0
        %1537 = vmatpush1.msra.mxu0 0.0
        %1538 = vmatprep.subr.mxu0 0.0
        %1539 = vmatpush1.msra.mxu0 0.0
        %1540 = vmatprep.subr.mxu0 0.0
        %1541 = vmatpush1.msra.mxu0 0.0
        %1542 = vmatprep.subr.mxu0 0.0
        %1543 = vmatpush1.msra.mxu0 0.0
        %1544 = vmatprep.subr.mxu0 0.0
        %1545 = vmatpush1.msra.mxu0 0.0
        %1546 = vmatprep.subr.mxu0 0.0
        %1547 = vmatpush1.msra.mxu0 0.0
        %1548 = vmatprep.subr.mxu0 0.0
        %1549 = vmatpush1.msra.mxu0 0.0
        %1550 = vmatprep.subr.mxu0 0.0
        %1551 = vmatpush1.msra.mxu0 0.0
        %1552 = vmatprep.subr.mxu0 0.0
        %1553 = vmatpush1.msra.mxu0 0.0
        %1554 = vmatprep.subr.mxu0 0.0
        %1555 = vmatpush1.msra.mxu0 0.0
        %1556 = vmatprep.subr.mxu0 0.0
        %1557 = vmatpush1.msra.mxu0 0.0
        %1558 = vmatprep.subr.mxu0 0.0
        %1559 = vmatpush1.msra.mxu0 0.0
        %1560 = vmatprep.subr.mxu0 0.0
        %1561 = vmatpush1.msra.mxu0 0.0
        %1562 = vmatprep.subr.mxu0 0.0
        %1563 = vmatpush1.msra.mxu0 0.0
        %1564 = vmatprep.subr.mxu0 0.0
        %1565 = vmatpush1.msra.mxu0 0.0
        %1566 = vmatprep.subr.mxu0 0.0
        %1567 = vmatpush1.msra.mxu0 0.0
        %1568 = vmatprep.subr.mxu0 0.0
        %1569 = vmatpush1.msra.mxu0 0.0
        %1570 = vmatprep.subr.mxu0 0.0
        %1571 = vmatpush1.msra.mxu0 0.0
        %1572 = vmatprep.subr.mxu0 0.0
        %1573 = vmatpush1.msra.mxu0 0.0
        %1574 = vmatprep.subr.mxu0 0.0
        %1575 = vmatpush1.msra.mxu0 0.0
        %1576 = vmatprep.subr.mxu0 0.0
        %1577 = vmatpush1.msra.mxu0 0.0
        %1578 = vmatprep.subr.mxu0 0.0
        %1579 = vmatpush1.msra.mxu0 0.0
        %1580 = vmatprep.subr.mxu0 0.0
        %1581 = vmatpush1.msra.mxu0 0.0
        %1582 = vmatprep.subr.mxu0 0.0
        %1583 = vmatpush1.msra.mxu0 0.0
        %1584 = vmatprep.subr.mxu0 0.0
        %1585 = vmatpush1.msra.mxu0 0.0
        %1586 = vmatprep.subr.mxu0 0.0
        %1587 = vmatpush1.msra.mxu0 0.0
        %1588 = vmatprep.subr.mxu0 0.0
        %1589 = vmatpush1.msra.mxu0 0.0
        %1590 = vmatprep.subr.mxu0 0.0
        %1591 = vmatpush1.msra.mxu0 0.0
        %1592 = vmatprep.subr.mxu0 0.0
        %1593 = vmatpush1.msra.mxu0 0.0
        %1594 = vmatprep.subr.mxu0 0.0
        %1595 = vmatpush1.msra.mxu0 0.0
        %1596 = vmatprep.subr.mxu0 0.0
        %1597 = vmatpush1.msra.mxu0 0.0
        %1598 = vmatprep.mubr.f32.mxu0 0.0
        %v1599 = vand.u32 %v1378, 4294901760
        %v1600 = vsub.f32 %v1378, %v1599
        %1601 = vmatmul.mubr.f32.gmra.mrb[0].mxu0 %v1600
        %v1602 = vpop.f32.mrb[0].mxu0
        %v1603 = vadd.f32 %v1529, %v1602
        %v1604 = vpop.f32.mrb[0].mxu0
        %1605 = vdwg.mxu0
        %1606 = vmatprep.subr.mxu0 0.0
        %v1607 = vand.u32 %v418, 4294901760
        %1608 = vmatpush1.msra.mxu0 %v1607
        %1609 = vmatprep.subr.mxu0 0.0
        %1610 = vmatpush1.msra.mxu0 0.0
        %1611 = vmatprep.subr.mxu0 0.0
        %1612 = vmatpush1.msra.mxu0 0.0
        %1613 = vmatprep.subr.mxu0 0.0
        %1614 = vmatpush1.msra.mxu0 0.0
        %1615 = vmatprep.subr.mxu0 0.0
        %1616 = vmatpush1.msra.mxu0 0.0
        %1617 = vmatprep.subr.mxu0 0.0
        %1618 = vmatpush1.msra.mxu0 0.0
        %1619 = vmatprep.subr.mxu0 0.0
        %1620 = vmatpush1.msra.mxu0 0.0
        %1621 = vmatprep.subr.mxu0 0.0
        %1622 = vmatpush1.msra.mxu0 0.0
        %1623 = vmatprep.subr.mxu0 0.0
        %1624 = vmatpush1.msra.mxu0 0.0
        %1625 = vmatprep.subr.mxu0 0.0
        %1626 = vmatpush1.msra.mxu0 0.0
        %1627 = vmatprep.subr.mxu0 0.0
        %1628 = vmatpush1.msra.mxu0 0.0
        %1629 = vmatprep.subr.mxu0 0.0
        %1630 = vmatpush1.msra.mxu0 0.0
        %1631 = vmatprep.subr.mxu0 0.0
        %1632 = vmatpush1.msra.mxu0 0.0
        %1633 = vmatprep.subr.mxu0 0.0
        %1634 = vmatpush1.msra.mxu0 0.0
        %1635 = vmatprep.subr.mxu0 0.0
        %1636 = vmatpush1.msra.mxu0 0.0
        %1637 = vmatprep.subr.mxu0 0.0
        %1638 = vmatpush1.msra.mxu0 0.0
        %1639 = vmatprep.subr.mxu0 0.0
        %1640 = vmatpush1.msra.mxu0 0.0
        %1641 = vmatprep.subr.mxu0 0.0
        %1642 = vmatpush1.msra.mxu0 0.0
        %1643 = vmatprep.subr.mxu0 0.0
        %1644 = vmatpush1.msra.mxu0 0.0
        %1645 = vmatprep.subr.mxu0 0.0
        %1646 = vmatpush1.msra.mxu0 0.0
        %1647 = vmatprep.subr.mxu0 0.0
        %1648 = vmatpush1.msra.mxu0 0.0
        %1649 = vmatprep.subr.mxu0 0.0
        %1650 = vmatpush1.msra.mxu0 0.0
        %1651 = vmatprep.subr.mxu0 0.0
        %1652 = vmatpush1.msra.mxu0 0.0
        %1653 = vmatprep.subr.mxu0 0.0
        %1654 = vmatpush1.msra.mxu0 0.0
        %1655 = vmatprep.subr.mxu0 0.0
        %1656 = vmatpush1.msra.mxu0 0.0
        %1657 = vmatprep.subr.mxu0 0.0
        %1658 = vmatpush1.msra.mxu0 0.0
        %1659 = vmatprep.subr.mxu0 0.0
        %1660 = vmatpush1.msra.mxu0 0.0
        %1661 = vmatprep.subr.mxu0 0.0
        %1662 = vmatpush1.msra.mxu0 0.0
        %1663 = vmatprep.subr.mxu0 0.0
        %1664 = vmatpush1.msra.mxu0 0.0
        %1665 = vmatprep.subr.mxu0 0.0
        %1666 = vmatpush1.msra.mxu0 0.0
        %1667 = vmatprep.subr.mxu0 0.0
        %1668 = vmatpush1.msra.mxu0 0.0
        %1669 = vmatprep.subr.mxu0 0.0
        %1670 = vmatpush1.msra.mxu0 0.0
        %1671 = vmatprep.mubr.f32.mxu0 0.0
        %v1672 = vand.u32 %v1378, 4294901760
        %v1673 = vsub.f32 %v1378, %v1672
        %v1674 = vand.u32 %v1673, 4294901760
        %1675 = vmatmul.mubr.f32.gmra.mrb[0].mxu0 %v1674
        %v1676 = vpop.f32.mrb[0].mxu0
        %v1677 = vadd.f32 %v1603, %v1676
        %v1678 = vpop.f32.mrb[0].mxu0
        %1679 = vdwg.mxu0
        %1680 = vmatprep.subr.mxu0 0.0
        %v1681 = vand.u32 %v418, 4294901760
        %v1682 = vsub.f32 %v418, %v1681
        %v1683 = vand.u32 %v1682, 4294901760
        %1684 = vmatpush1.msra.mxu0 %v1683
        %1685 = vmatprep.subr.mxu0 0.0
        %1686 = vmatpush1.msra.mxu0 0.0
        %1687 = vmatprep.subr.mxu0 0.0
        %1688 = vmatpush1.msra.mxu0 0.0
        %1689 = vmatprep.subr.mxu0 0.0
        %1690 = vmatpush1.msra.mxu0 0.0
        %1691 = vmatprep.subr.mxu0 0.0
        %1692 = vmatpush1.msra.mxu0 0.0
        %1693 = vmatprep.subr.mxu0 0.0
        %1694 = vmatpush1.msra.mxu0 0.0
        %1695 = vmatprep.subr.mxu0 0.0
        %1696 = vmatpush1.msra.mxu0 0.0
        %1697 = vmatprep.subr.mxu0 0.0
        %1698 = vmatpush1.msra.mxu0 0.0
        %1699 = vmatprep.subr.mxu0 0.0
        %1700 = vmatpush1.msra.mxu0 0.0
        %1701 = vmatprep.subr.mxu0 0.0
        %1702 = vmatpush1.msra.mxu0 0.0
        %1703 = vmatprep.subr.mxu0 0.0
        %1704 = vmatpush1.msra.mxu0 0.0
        %1705 = vmatprep.subr.mxu0 0.0
        %1706 = vmatpush1.msra.mxu0 0.0
        %1707 = vmatprep.subr.mxu0 0.0
        %1708 = vmatpush1.msra.mxu0 0.0
        %1709 = vmatprep.subr.mxu0 0.0
        %1710 = vmatpush1.msra.mxu0 0.0
        %1711 = vmatprep.subr.mxu0 0.0
        %1712 = vmatpush1.msra.mxu0 0.0
        %1713 = vmatprep.subr.mxu0 0.0
        %1714 = vmatpush1.msra.mxu0 0.0
        %1715 = vmatprep.subr.mxu0 0.0
        %1716 = vmatpush1.msra.mxu0 0.0
        %1717 = vmatprep.subr.mxu0 0.0
        %1718 = vmatpush1.msra.mxu0 0.0
        %1719 = vmatprep.subr.mxu0 0.0
        %1720 = vmatpush1.msra.mxu0 0.0
        %1721 = vmatprep.subr.mxu0 0.0
        %1722 = vmatpush1.msra.mxu0 0.0
        %1723 = vmatprep.subr.mxu0 0.0
        %1724 = vmatpush1.msra.mxu0 0.0
        %1725 = vmatprep.subr.mxu0 0.0
        %1726 = vmatpush1.msra.mxu0 0.0
        %1727 = vmatprep.subr.mxu0 0.0
        %1728 = vmatpush1.msra.mxu0 0.0
        %1729 = vmatprep.subr.mxu0 0.0
        %1730 = vmatpush1.msra.mxu0 0.0
        %1731 = vmatprep.subr.mxu0 0.0
        %1732 = vmatpush1.msra.mxu0 0.0
        %1733 = vmatprep.subr.mxu0 0.0
        %1734 = vmatpush1.msra.mxu0 0.0
        %1735 = vmatprep.subr.mxu0 0.0
        %1736 = vmatpush1.msra.mxu0 0.0
        %1737 = vmatprep.subr.mxu0 0.0
        %1738 = vmatpush1.msra.mxu0 0.0
        %1739 = vmatprep.subr.mxu0 0.0
        %1740 = vmatpush1.msra.mxu0 0.0
        %1741 = vmatprep.subr.mxu0 0.0
        %1742 = vmatpush1.msra.mxu0 0.0
        %1743 = vmatprep.subr.mxu0 0.0
        %1744 = vmatpush1.msra.mxu0 0.0
        %1745 = vmatprep.subr.mxu0 0.0
        %1746 = vmatpush1.msra.mxu0 0.0
        %1747 = vmatprep.mubr.f32.mxu0 0.0
        %v1748 = vand.u32 %v1378, 4294901760
        %1749 = vmatmul.mubr.f32.gmra.mrb[0].mxu0 %v1748
        %v1750 = vpop.f32.mrb[0].mxu0
        %v1751 = vadd.f32 %v1677, %v1750
        %v1752 = vpop.f32.mrb[0].mxu0
        %1753 = vdwg.mxu0
        %1754 = vmatprep.subr.mxu0 0.0
        %v1755 = vand.u32 %v418, 4294901760
        %1756 = vmatpush1.msra.mxu0 %v1755
        %1757 = vmatprep.subr.mxu0 0.0
        %1758 = vmatpush1.msra.mxu0 0.0
        %1759 = vmatprep.subr.mxu0 0.0
        %1760 = vmatpush1.msra.mxu0 0.0
        %1761 = vmatprep.subr.mxu0 0.0
        %1762 = vmatpush1.msra.mxu0 0.0
        %1763 = vmatprep.subr.mxu0 0.0
        %1764 = vmatpush1.msra.mxu0 0.0
        %1765 = vmatprep.subr.mxu0 0.0
        %1766 = vmatpush1.msra.mxu0 0.0
        %1767 = vmatprep.subr.mxu0 0.0
        %1768 = vmatpush1.msra.mxu0 0.0
        %1769 = vmatprep.subr.mxu0 0.0
        %1770 = vmatpush1.msra.mxu0 0.0
        %1771 = vmatprep.subr.mxu0 0.0
        %1772 = vmatpush1.msra.mxu0 0.0
        %1773 = vmatprep.subr.mxu0 0.0
        %1774 = vmatpush1.msra.mxu0 0.0
        %1775 = vmatprep.subr.mxu0 0.0
        %1776 = vmatpush1.msra.mxu0 0.0
        %1777 = vmatprep.subr.mxu0 0.0
        %1778 = vmatpush1.msra.mxu0 0.0
        %1779 = vmatprep.subr.mxu0 0.0
        %1780 = vmatpush1.msra.mxu0 0.0
        %1781 = vmatprep.subr.mxu0 0.0
        %1782 = vmatpush1.msra.mxu0 0.0
        %1783 = vmatprep.subr.mxu0 0.0
        %1784 = vmatpush1.msra.mxu0 0.0
        %1785 = vmatprep.subr.mxu0 0.0
        %1786 = vmatpush1.msra.mxu0 0.0
        %1787 = vmatprep.subr.mxu0 0.0
        %1788 = vmatpush1.msra.mxu0 0.0
        %1789 = vmatprep.subr.mxu0 0.0
        %1790 = vmatpush1.msra.mxu0 0.0
        %1791 = vmatprep.subr.mxu0 0.0
        %1792 = vmatpush1.msra.mxu0 0.0
        %1793 = vmatprep.subr.mxu0 0.0
        %1794 = vmatpush1.msra.mxu0 0.0
        %1795 = vmatprep.subr.mxu0 0.0
        %1796 = vmatpush1.msra.mxu0 0.0
        %1797 = vmatprep.subr.mxu0 0.0
        %1798 = vmatpush1.msra.mxu0 0.0
        %1799 = vmatprep.subr.mxu0 0.0
        %1800 = vmatpush1.msra.mxu0 0.0
        %1801 = vmatprep.subr.mxu0 0.0
        %1802 = vmatpush1.msra.mxu0 0.0
        %1803 = vmatprep.subr.mxu0 0.0
        %1804 = vmatpush1.msra.mxu0 0.0
        %1805 = vmatprep.subr.mxu0 0.0
        %1806 = vmatpush1.msra.mxu0 0.0
        %1807 = vmatprep.subr.mxu0 0.0
        %1808 = vmatpush1.msra.mxu0 0.0
        %1809 = vmatprep.subr.mxu0 0.0
        %1810 = vmatpush1.msra.mxu0 0.0
        %1811 = vmatprep.subr.mxu0 0.0
        %1812 = vmatpush1.msra.mxu0 0.0
        %1813 = vmatprep.subr.mxu0 0.0
        %1814 = vmatpush1.msra.mxu0 0.0
        %1815 = vmatprep.subr.mxu0 0.0
        %1816 = vmatpush1.msra.mxu0 0.0
        %1817 = vmatprep.subr.mxu0 0.0
        %1818 = vmatpush1.msra.mxu0 0.0
        %1819 = vmatprep.mubr.f32.mxu0 0.0
        %v1820 = vand.u32 %v1378, 4294901760
        %1821 = vmatmul.mubr.f32.gmra.mrb[0].mxu0 %v1820
        %v1822 = vpop.f32.mrb[0].mxu0
        %v1823 = vadd.f32 %v1751, %v1822
        %v1824 = vpop.f32.mrb[0].mxu0
        %1825 = vdwg.mxu0
        %1826 = vmatprep.subr.mxu0 0.0
        %v1827 = vand.u32 %v1823, 4294901760
        %1828 = vmatpush1.msra.mxu0 %v1827
        %1829 = vmatprep.subr.mxu0 0.0
        %1830 = vmatpush1.msra.mxu0 0.0
        %1831 = vmatprep.subr.mxu0 0.0
        %1832 = vmatpush1.msra.mxu0 0.0
        %1833 = vmatprep.subr.mxu0 0.0
        %1834 = vmatpush1.msra.mxu0 0.0
        %1835 = vmatprep.subr.mxu0 0.0
        %1836 = vmatpush1.msra.mxu0 0.0
        %1837 = vmatprep.subr.mxu0 0.0
        %1838 = vmatpush1.msra.mxu0 0.0
        %1839 = vmatprep.subr.mxu0 0.0
        %1840 = vmatpush1.msra.mxu0 0.0
        %1841 = vmatprep.subr.mxu0 0.0
        %1842 = vmatpush1.msra.mxu0 0.0
        %1843 = vmatprep.subr.mxu0 0.0
        %1844 = vmatpush1.msra.mxu0 0.0
        %1845 = vmatprep.subr.mxu0 0.0
        %1846 = vmatpush1.msra.mxu0 0.0
        %1847 = vmatprep.subr.mxu0 0.0
        %1848 = vmatpush1.msra.mxu0 0.0
        %1849 = vmatprep.subr.mxu0 0.0
        %1850 = vmatpush1.msra.mxu0 0.0
        %1851 = vmatprep.subr.mxu0 0.0
        %1852 = vmatpush1.msra.mxu0 0.0
        %1853 = vmatprep.subr.mxu0 0.0
        %1854 = vmatpush1.msra.mxu0 0.0
        %1855 = vmatprep.subr.mxu0 0.0
        %1856 = vmatpush1.msra.mxu0 0.0
        %1857 = vmatprep.subr.mxu0 0.0
        %1858 = vmatpush1.msra.mxu0 0.0
        %1859 = vmatprep.subr.mxu0 0.0
        %1860 = vmatpush1.msra.mxu0 0.0
        %1861 = vmatprep.subr.mxu0 0.0
        %1862 = vmatpush1.msra.mxu0 0.0
        %1863 = vmatprep.subr.mxu0 0.0
        %1864 = vmatpush1.msra.mxu0 0.0
        %1865 = vmatprep.subr.mxu0 0.0
        %1866 = vmatpush1.msra.mxu0 0.0
        %1867 = vmatprep.subr.mxu0 0.0
        %1868 = vmatpush1.msra.mxu0 0.0
        %1869 = vmatprep.subr.mxu0 0.0
        %1870 = vmatpush1.msra.mxu0 0.0
        %1871 = vmatprep.subr.mxu0 0.0
        %1872 = vmatpush1.msra.mxu0 0.0
        %1873 = vmatprep.subr.mxu0 0.0
        %1874 = vmatpush1.msra.mxu0 0.0
        %1875 = vmatprep.subr.mxu0 0.0
        %1876 = vmatpush1.msra.mxu0 0.0
        %1877 = vmatprep.subr.mxu0 0.0
        %1878 = vmatpush1.msra.mxu0 0.0
        %1879 = vmatprep.subr.mxu0 0.0
        %1880 = vmatpush1.msra.mxu0 0.0
        %1881 = vmatprep.subr.mxu0 0.0
        %1882 = vmatpush1.msra.mxu0 0.0
        %1883 = vmatprep.subr.mxu0 0.0
        %1884 = vmatpush1.msra.mxu0 0.0
        %1885 = vmatprep.subr.mxu0 0.0
        %1886 = vmatpush1.msra.mxu0 0.0
        %1887 = vmatprep.subr.mxu0 0.0
        %1888 = vmatpush1.msra.mxu0 0.0
        %1889 = vmatprep.subr.mxu0 0.0
        %1890 = vmatpush1.msra.mxu0 0.0
        %1891 = vmatprep.mubr.f32.mxu0 0.0
        %v1892 = vand.u32 %v883, 4294901760
        %v1893 = vsub.f32 %v883, %v1892
        %v1894 = vand.u32 %v1893, 4294901760
        %v1895 = vsub.f32 %v1893, %v1894
        %v1896 = vand.u32 %v1895, 4294901760
        %1897 = vmatmul.mubr.f32.gmra.mrb[0].mxu0 %v1896
        %v1898 = vpop.f32.mrb[0].mxu0
        %v1899 = vadd.f32 0.0, %v1898
        %v1900 = vpop.f32.mrb[0].mxu0
        %1901 = vmatprep.mubr.f32.mxu0 0.0
        %v1902 = vand.u32 %v886, 4294901760
        %v1903 = vsub.f32 %v886, %v1902
        %v1904 = vand.u32 %v1903, 4294901760
        %v1905 = vsub.f32 %v1903, %v1904
        %v1906 = vand.u32 %v1905, 4294901760
        %1907 = vmatmul.mubr.f32.gmra.mrb[0].mxu0 %v1906
        %v1908 = vpop.f32.mrb[0].mxu0
        %v1909 = vadd.f32 0.0, %v1908
        %v1910 = vpop.f32.mrb[0].mxu0
        %1911 = vdwg.mxu0
        %1912 = vmatprep.subr.mxu0 0.0
        %v1913 = vand.u32 %v1823, 4294901760
        %v1914 = vsub.f32 %v1823, %v1913
        %v1915 = vand.u32 %v1914, 4294901760
        %v1916 = vsub.f32 %v1914, %v1915
        %v1917 = vand.u32 %v1916, 4294901760
        %1918 = vmatpush1.msra.mxu0 %v1917
        %1919 = vmatprep.subr.mxu0 0.0
        %1920 = vmatpush1.msra.mxu0 0.0
        %1921 = vmatprep.subr.mxu0 0.0
        %1922 = vmatpush1.msra.mxu0 0.0
        %1923 = vmatprep.subr.mxu0 0.0
        %1924 = vmatpush1.msra.mxu0 0.0
        %1925 = vmatprep.subr.mxu0 0.0
        %1926 = vmatpush1.msra.mxu0 0.0
        %1927 = vmatprep.subr.mxu0 0.0
        %1928 = vmatpush1.msra.mxu0 0.0
        %1929 = vmatprep.subr.mxu0 0.0
        %1930 = vmatpush1.msra.mxu0 0.0
        %1931 = vmatprep.subr.mxu0 0.0
        %1932 = vmatpush1.msra.mxu0 0.0
        %1933 = vmatprep.subr.mxu0 0.0
        %1934 = vmatpush1.msra.mxu0 0.0
        %1935 = vmatprep.subr.mxu0 0.0
        %1936 = vmatpush1.msra.mxu0 0.0
        %1937 = vmatprep.subr.mxu0 0.0
        %1938 = vmatpush1.msra.mxu0 0.0
        %1939 = vmatprep.subr.mxu0 0.0
        %1940 = vmatpush1.msra.mxu0 0.0
        %1941 = vmatprep.subr.mxu0 0.0
        %1942 = vmatpush1.msra.mxu0 0.0
        %1943 = vmatprep.subr.mxu0 0.0
        %1944 = vmatpush1.msra.mxu0 0.0
        %1945 = vmatprep.subr.mxu0 0.0
        %1946 = vmatpush1.msra.mxu0 0.0
        %1947 = vmatprep.subr.mxu0 0.0
        %1948 = vmatpush1.msra.mxu0 0.0
        %1949 = vmatprep.subr.mxu0 0.0
        %1950 = vmatpush1.msra.mxu0 0.0
        %1951 = vmatprep.subr.mxu0 0.0
        %1952 = vmatpush1.msra.mxu0 0.0
        %1953 = vmatprep.subr.mxu0 0.0
        %1954 = vmatpush1.msra.mxu0 0.0
        %1955 = vmatprep.subr.mxu0 0.0
        %1956 = vmatpush1.msra.mxu0 0.0
        %1957 = vmatprep.subr.mxu0 0.0
        %1958 = vmatpush1.msra.mxu0 0.0
        %1959 = vmatprep.subr.mxu0 0.0
        %1960 = vmatpush1.msra.mxu0 0.0
        %1961 = vmatprep.subr.mxu0 0.0
        %1962 = vmatpush1.msra.mxu0 0.0
        %1963 = vmatprep.subr.mxu0 0.0
        %1964 = vmatpush1.msra.mxu0 0.0
        %1965 = vmatprep.subr.mxu0 0.0
        %1966 = vmatpush1.msra.mxu0 0.0
        %1967 = vmatprep.subr.mxu0 0.0
        %1968 = vmatpush1.msra.mxu0 0.0
        %1969 = vmatprep.subr.mxu0 0.0
        %1970 = vmatpush1.msra.mxu0 0.0
        %1971 = vmatprep.subr.mxu0 0.0
        %1972 = vmatpush1.msra.mxu0 0.0
        %1973 = vmatprep.subr.mxu0 0.0
        %1974 = vmatpush1.msra.mxu0 0.0
        %1975 = vmatprep.subr.mxu0 0.0
        %1976 = vmatpush1.msra.mxu0 0.0
        %1977 = vmatprep.subr.mxu0 0.0
        %1978 = vmatpush1.msra.mxu0 0.0
        %1979 = vmatprep.subr.mxu0 0.0
        %1980 = vmatpush1.msra.mxu0 0.0
        %1981 = vmatprep.mubr.f32.mxu0 0.0
        %v1982 = vand.u32 %v883, 4294901760
        %1983 = vmatmul.mubr.f32.gmra.mrb[0].mxu0 %v1982
        %v1984 = vpop.f32.mrb[0].mxu0
        %v1985 = vadd.f32 %v1899, %v1984
        %v1986 = vpop.f32.mrb[0].mxu0
        %1987 = vmatprep.mubr.f32.mxu0 0.0
        %v1988 = vand.u32 %v886, 4294901760
        %1989 = vmatmul.mubr.f32.gmra.mrb[0].mxu0 %v1988
        %v1990 = vpop.f32.mrb[0].mxu0
        %v1991 = vadd.f32 %v1909, %v1990
        %v1992 = vpop.f32.mrb[0].mxu0
        %1993 = vdwg.mxu0
        %1994 = vmatprep.subr.mxu0 0.0
        %v1995 = vand.u32 %v1823, 4294901760
        %v1996 = vsub.f32 %v1823, %v1995
        %1997 = vmatpush1.msra.mxu0 %v1996
        %1998 = vmatprep.subr.mxu0 0.0
        %1999 = vmatpush1.msra.mxu0 0.0
        %2000 = vmatprep.subr.mxu0 0.0
        %2001 = vmatpush1.msra.mxu0 0.0
        %2002 = vmatprep.subr.mxu0 0.0
        %2003 = vmatpush1.msra.mxu0 0.0
        %2004 = vmatprep.subr.mxu0 0.0
        %2005 = vmatpush1.msra.mxu0 0.0
        %2006 = vmatprep.subr.mxu0 0.0
        %2007 = vmatpush1.msra.mxu0 0.0
        %2008 = vmatprep.subr.mxu0 0.0
        %2009 = vmatpush1.msra.mxu0 0.0
        %2010 = vmatprep.subr.mxu0 0.0
        %2011 = vmatpush1.msra.mxu0 0.0
        %2012 = vmatprep.subr.mxu0 0.0
        %2013 = vmatpush1.msra.mxu0 0.0
        %2014 = vmatprep.subr.mxu0 0.0
        %2015 = vmatpush1.msra.mxu0 0.0
        %2016 = vmatprep.subr.mxu0 0.0
        %2017 = vmatpush1.msra.mxu0 0.0
        %2018 = vmatprep.subr.mxu0 0.0
        %2019 = vmatpush1.msra.mxu0 0.0
        %2020 = vmatprep.subr.mxu0 0.0
        %2021 = vmatpush1.msra.mxu0 0.0
        %2022 = vmatprep.subr.mxu0 0.0
        %2023 = vmatpush1.msra.mxu0 0.0
        %2024 = vmatprep.subr.mxu0 0.0
        %2025 = vmatpush1.msra.mxu0 0.0
        %2026 = vmatprep.subr.mxu0 0.0
        %2027 = vmatpush1.msra.mxu0 0.0
        %2028 = vmatprep.subr.mxu0 0.0
        %2029 = vmatpush1.msra.mxu0 0.0
        %2030 = vmatprep.subr.mxu0 0.0
        %2031 = vmatpush1.msra.mxu0 0.0
        %2032 = vmatprep.subr.mxu0 0.0
        %2033 = vmatpush1.msra.mxu0 0.0
        %2034 = vmatprep.subr.mxu0 0.0
        %2035 = vmatpush1.msra.mxu0 0.0
        %2036 = vmatprep.subr.mxu0 0.0
        %2037 = vmatpush1.msra.mxu0 0.0
        %2038 = vmatprep.subr.mxu0 0.0
        %2039 = vmatpush1.msra.mxu0 0.0
        %2040 = vmatprep.subr.mxu0 0.0
        %2041 = vmatpush1.msra.mxu0 0.0
        %2042 = vmatprep.subr.mxu0 0.0
        %2043 = vmatpush1.msra.mxu0 0.0
        %2044 = vmatprep.subr.mxu0 0.0
        %2045 = vmatpush1.msra.mxu0 0.0
        %2046 = vmatprep.subr.mxu0 0.0
        %2047 = vmatpush1.msra.mxu0 0.0
        %2048 = vmatprep.subr.mxu0 0.0
        %2049 = vmatpush1.msra.mxu0 0.0
        %2050 = vmatprep.subr.mxu0 0.0
        %2051 = vmatpush1.msra.mxu0 0.0
        %2052 = vmatprep.subr.mxu0 0.0
        %2053 = vmatpush1.msra.mxu0 0.0
        %2054 = vmatprep.subr.mxu0 0.0
        %2055 = vmatpush1.msra.mxu0 0.0
        %2056 = vmatprep.subr.mxu0 0.0
        %2057 = vmatpush1.msra.mxu0 0.0
        %2058 = vmatprep.subr.mxu0 0.0
        %2059 = vmatpush1.msra.mxu0 0.0
        %2060 = vmatprep.mubr.f32.mxu0 0.0
        %v2061 = vand.u32 %v883, 4294901760
        %v2062 = vsub.f32 %v883, %v2061
        %2063 = vmatmul.mubr.f32.gmra.mrb[0].mxu0 %v2062
        %v2064 = vpop.f32.mrb[0].mxu0
        %v2065 = vadd.f32 %v1985, %v2064
        %v2066 = vpop.f32.mrb[0].mxu0
        %2067 = vmatprep.mubr.f32.mxu0 0.0
        %v2068 = vand.u32 %v886, 4294901760
        %v2069 = vsub.f32 %v886, %v2068
        %2070 = vmatmul.mubr.f32.gmra.mrb[0].mxu0 %v2069
        %v2071 = vpop.f32.mrb[0].mxu0
        %v2072 = vadd.f32 %v1991, %v2071
        %v2073 = vpop.f32.mrb[0].mxu0
        %2074 = vdwg.mxu0
        %2075 = vmatprep.subr.mxu0 0.0
        %v2076 = vand.u32 %v1823, 4294901760
        %2077 = vmatpush1.msra.mxu0 %v2076
        %2078 = vmatprep.subr.mxu0 0.0
        %2079 = vmatpush1.msra.mxu0 0.0
        %2080 = vmatprep.subr.mxu0 0.0
        %2081 = vmatpush1.msra.mxu0 0.0
        %2082 = vmatprep.subr.mxu0 0.0
        %2083 = vmatpush1.msra.mxu0 0.0
        %2084 = vmatprep.subr.mxu0 0.0
        %2085 = vmatpush1.msra.mxu0 0.0
        %2086 = vmatprep.subr.mxu0 0.0
        %2087 = vmatpush1.msra.mxu0 0.0
        %2088 = vmatprep.subr.mxu0 0.0
        %2089 = vmatpush1.msra.mxu0 0.0
        %2090 = vmatprep.subr.mxu0 0.0
        %2091 = vmatpush1.msra.mxu0 0.0
        %2092 = vmatprep.subr.mxu0 0.0
        %2093 = vmatpush1.msra.mxu0 0.0
        %2094 = vmatprep.subr.mxu0 0.0
        %2095 = vmatpush1.msra.mxu0 0.0
        %2096 = vmatprep.subr.mxu0 0.0
        %2097 = vmatpush1.msra.mxu0 0.0
        %2098 = vmatprep.subr.mxu0 0.0
        %2099 = vmatpush1.msra.mxu0 0.0
        %2100 = vmatprep.subr.mxu0 0.0
        %2101 = vmatpush1.msra.mxu0 0.0
        %2102 = vmatprep.subr.mxu0 0.0
        %2103 = vmatpush1.msra.mxu0 0.0
        %2104 = vmatprep.subr.mxu0 0.0
        %2105 = vmatpush1.msra.mxu0 0.0
        %2106 = vmatprep.subr.mxu0 0.0
        %2107 = vmatpush1.msra.mxu0 0.0
        %2108 = vmatprep.subr.mxu0 0.0
        %2109 = vmatpush1.msra.mxu0 0.0
        %2110 = vmatprep.subr.mxu0 0.0
        %2111 = vmatpush1.msra.mxu0 0.0
        %2112 = vmatprep.subr.mxu0 0.0
        %2113 = vmatpush1.msra.mxu0 0.0
        %2114 = vmatprep.subr.mxu0 0.0
        %2115 = vmatpush1.msra.mxu0 0.0
        %2116 = vmatprep.subr.mxu0 0.0
        %2117 = vmatpush1.msra.mxu0 0.0
        %2118 = vmatprep.subr.mxu0 0.0
        %2119 = vmatpush1.msra.mxu0 0.0
        %2120 = vmatprep.subr.mxu0 0.0
        %2121 = vmatpush1.msra.mxu0 0.0
        %2122 = vmatprep.subr.mxu0 0.0
        %2123 = vmatpush1.msra.mxu0 0.0
        %2124 = vmatprep.subr.mxu0 0.0
        %2125 = vmatpush1.msra.mxu0 0.0
        %2126 = vmatprep.subr.mxu0 0.0
        %2127 = vmatpush1.msra.mxu0 0.0
        %2128 = vmatprep.subr.mxu0 0.0
        %2129 = vmatpush1.msra.mxu0 0.0
        %2130 = vmatprep.subr.mxu0 0.0
        %2131 = vmatpush1.msra.mxu0 0.0
        %2132 = vmatprep.subr.mxu0 0.0
        %2133 = vmatpush1.msra.mxu0 0.0
        %2134 = vmatprep.subr.mxu0 0.0
        %2135 = vmatpush1.msra.mxu0 0.0
        %2136 = vmatprep.subr.mxu0 0.0
        %2137 = vmatpush1.msra.mxu0 0.0
        %2138 = vmatprep.subr.mxu0 0.0
        %2139 = vmatpush1.msra.mxu0 0.0
        %2140 = vmatprep.mubr.f32.mxu0 0.0
        %v2141 = vand.u32 %v883, 4294901760
        %v2142 = vsub.f32 %v883, %v2141
        %v2143 = vand.u32 %v2142, 4294901760
        %2144 = vmatmul.mubr.f32.gmra.mrb[0].mxu0 %v2143
        %v2145 = vpop.f32.mrb[0].mxu0
        %v2146 = vadd.f32 %v2065, %v2145
        %v2147 = vpop.f32.mrb[0].mxu0
        %2148 = vmatprep.mubr.f32.mxu0 0.0
        %v2149 = vand.u32 %v886, 4294901760
        %v2150 = vsub.f32 %v886, %v2149
        %v2151 = vand.u32 %v2150, 4294901760
        %2152 = vmatmul.mubr.f32.gmra.mrb[0].mxu0 %v2151
        %v2153 = vpop.f32.mrb[0].mxu0
        %v2154 = vadd.f32 %v2072, %v2153
        %v2155 = vpop.f32.mrb[0].mxu0
        %2156 = vdwg.mxu0
        %2157 = vmatprep.subr.mxu0 0.0
        %v2158 = vand.u32 %v1823, 4294901760
        %v2159 = vsub.f32 %v1823, %v2158
        %v2160 = vand.u32 %v2159, 4294901760
        %2161 = vmatpush1.msra.mxu0 %v2160
        %2162 = vmatprep.subr.mxu0 0.0
        %2163 = vmatpush1.msra.mxu0 0.0
        %2164 = vmatprep.subr.mxu0 0.0
        %2165 = vmatpush1.msra.mxu0 0.0
        %2166 = vmatprep.subr.mxu0 0.0
        %2167 = vmatpush1.msra.mxu0 0.0
        %2168 = vmatprep.subr.mxu0 0.0
        %2169 = vmatpush1.msra.mxu0 0.0
        %2170 = vmatprep.subr.mxu0 0.0
        %2171 = vmatpush1.msra.mxu0 0.0
        %2172 = vmatprep.subr.mxu0 0.0
        %2173 = vmatpush1.msra.mxu0 0.0
        %2174 = vmatprep.subr.mxu0 0.0
        %2175 = vmatpush1.msra.mxu0 0.0
        %2176 = vmatprep.subr.mxu0 0.0
        %2177 = vmatpush1.msra.mxu0 0.0
        %2178 = vmatprep.subr.mxu0 0.0
        %2179 = vmatpush1.msra.mxu0 0.0
        %2180 = vmatprep.subr.mxu0 0.0
        %2181 = vmatpush1.msra.mxu0 0.0
        %2182 = vmatprep.subr.mxu0 0.0
        %2183 = vmatpush1.msra.mxu0 0.0
        %2184 = vmatprep.subr.mxu0 0.0
        %2185 = vmatpush1.msra.mxu0 0.0
        %2186 = vmatprep.subr.mxu0 0.0
        %2187 = vmatpush1.msra.mxu0 0.0
        %2188 = vmatprep.subr.mxu0 0.0
        %2189 = vmatpush1.msra.mxu0 0.0
        %2190 = vmatprep.subr.mxu0 0.0
        %2191 = vmatpush1.msra.mxu0 0.0
        %2192 = vmatprep.subr.mxu0 0.0
        %2193 = vmatpush1.msra.mxu0 0.0
        %2194 = vmatprep.subr.mxu0 0.0
        %2195 = vmatpush1.msra.mxu0 0.0
        %2196 = vmatprep.subr.mxu0 0.0
        %2197 = vmatpush1.msra.mxu0 0.0
        %2198 = vmatprep.subr.mxu0 0.0
        %2199 = vmatpush1.msra.mxu0 0.0
        %2200 = vmatprep.subr.mxu0 0.0
        %2201 = vmatpush1.msra.mxu0 0.0
        %2202 = vmatprep.subr.mxu0 0.0
        %2203 = vmatpush1.msra.mxu0 0.0
        %2204 = vmatprep.subr.mxu0 0.0
        %2205 = vmatpush1.msra.mxu0 0.0
        %2206 = vmatprep.subr.mxu0 0.0
        %2207 = vmatpush1.msra.mxu0 0.0
        %2208 = vmatprep.subr.mxu0 0.0
        %2209 = vmatpush1.msra.mxu0 0.0
        %2210 = vmatprep.subr.mxu0 0.0
        %2211 = vmatpush1.msra.mxu0 0.0
        %2212 = vmatprep.subr.mxu0 0.0
        %2213 = vmatpush1.msra.mxu0 0.0
        %2214 = vmatprep.subr.mxu0 0.0
        %2215 = vmatpush1.msra.mxu0 0.0
        %2216 = vmatprep.subr.mxu0 0.0
        %2217 = vmatpush1.msra.mxu0 0.0
        %2218 = vmatprep.subr.mxu0 0.0
        %2219 = vmatpush1.msra.mxu0 0.0
        %2220 = vmatprep.subr.mxu0 0.0
        %2221 = vmatpush1.msra.mxu0 0.0
        %2222 = vmatprep.subr.mxu0 0.0
        %2223 = vmatpush1.msra.mxu0 0.0
        %2224 = vmatprep.mubr.f32.mxu0 0.0
        %v2225 = vand.u32 %v883, 4294901760
        %2226 = vmatmul.mubr.f32.gmra.mrb[0].mxu0 %v2225
        %v2227 = vpop.f32.mrb[0].mxu0
        %v2228 = vadd.f32 %v2146, %v2227
        %v2229 = vpop.f32.mrb[0].mxu0
        %2230 = vmatprep.mubr.f32.mxu0 0.0
        %v2231 = vand.u32 %v886, 4294901760
        %2232 = vmatmul.mubr.f32.gmra.mrb[0].mxu0 %v2231
        %v2233 = vpop.f32.mrb[0].mxu0
        %v2234 = vadd.f32 %v2154, %v2233
        %v2235 = vpop.f32.mrb[0].mxu0
        %2236 = vdwg.mxu0
        %2237 = vmatprep.subr.mxu0 0.0
        %v2238 = vand.u32 %v1823, 4294901760
        %2239 = vmatpush1.msra.mxu0 %v2238
        %2240 = vmatprep.subr.mxu0 0.0
        %2241 = vmatpush1.msra.mxu0 0.0
        %2242 = vmatprep.subr.mxu0 0.0
        %2243 = vmatpush1.msra.mxu0 0.0
        %2244 = vmatprep.subr.mxu0 0.0
        %2245 = vmatpush1.msra.mxu0 0.0
        %2246 = vmatprep.subr.mxu0 0.0
        %2247 = vmatpush1.msra.mxu0 0.0
        %2248 = vmatprep.subr.mxu0 0.0
        %2249 = vmatpush1.msra.mxu0 0.0
        %2250 = vmatprep.subr.mxu0 0.0
        %2251 = vmatpush1.msra.mxu0 0.0
        %2252 = vmatprep.subr.mxu0 0.0
        %2253 = vmatpush1.msra.mxu0 0.0
        %2254 = vmatprep.subr.mxu0 0.0
        %2255 = vmatpush1.msra.mxu0 0.0
        %2256 = vmatprep.subr.mxu0 0.0
        %2257 = vmatpush1.msra.mxu0 0.0
        %2258 = vmatprep.subr.mxu0 0.0
        %2259 = vmatpush1.msra.mxu0 0.0
        %2260 = vmatprep.subr.mxu0 0.0
        %2261 = vmatpush1.msra.mxu0 0.0
        %2262 = vmatprep.subr.mxu0 0.0
        %2263 = vmatpush1.msra.mxu0 0.0
        %2264 = vmatprep.subr.mxu0 0.0
        %2265 = vmatpush1.msra.mxu0 0.0
        %2266 = vmatprep.subr.mxu0 0.0
        %2267 = vmatpush1.msra.mxu0 0.0
        %2268 = vmatprep.subr.mxu0 0.0
        %2269 = vmatpush1.msra.mxu0 0.0
        %2270 = vmatprep.subr.mxu0 0.0
        %2271 = vmatpush1.msra.mxu0 0.0
        %2272 = vmatprep.subr.mxu0 0.0
        %2273 = vmatpush1.msra.mxu0 0.0
        %2274 = vmatprep.subr.mxu0 0.0
        %2275 = vmatpush1.msra.mxu0 0.0
        %2276 = vmatprep.subr.mxu0 0.0
        %2277 = vmatpush1.msra.mxu0 0.0
        %2278 = vmatprep.subr.mxu0 0.0
        %2279 = vmatpush1.msra.mxu0 0.0
        %2280 = vmatprep.subr.mxu0 0.0
        %2281 = vmatpush1.msra.mxu0 0.0
        %2282 = vmatprep.subr.mxu0 0.0
        %2283 = vmatpush1.msra.mxu0 0.0
        %2284 = vmatprep.subr.mxu0 0.0
        %2285 = vmatpush1.msra.mxu0 0.0
        %2286 = vmatprep.subr.mxu0 0.0
        %2287 = vmatpush1.msra.mxu0 0.0
        %2288 = vmatprep.subr.mxu0 0.0
        %2289 = vmatpush1.msra.mxu0 0.0
        %2290 = vmatprep.subr.mxu0 0.0
        %2291 = vmatpush1.msra.mxu0 0.0
        %2292 = vmatprep.subr.mxu0 0.0
        %2293 = vmatpush1.msra.mxu0 0.0
        %2294 = vmatprep.subr.mxu0 0.0
        %2295 = vmatpush1.msra.mxu0 0.0
        %2296 = vmatprep.subr.mxu0 0.0
        %2297 = vmatpush1.msra.mxu0 0.0
        %2298 = vmatprep.subr.mxu0 0.0
        %2299 = vmatpush1.msra.mxu0 0.0
        %2300 = vmatprep.subr.mxu0 0.0
        %2301 = vmatpush1.msra.mxu0 0.0
        %2302 = vmatprep.mubr.f32.mxu0 0.0
        %v2303 = vand.u32 %v883, 4294901760
        %2304 = vmatmul.mubr.f32.gmra.mrb[0].mxu0 %v2303
        %v2305 = vpop.f32.mrb[0].mxu0
        %v2306 = vadd.f32 %v2228, %v2305
        %v2307 = vpop.f32.mrb[0].mxu0
        %2308 = vmatprep.mubr.f32.mxu0 0.0
        %v2309 = vand.u32 %v886, 4294901760
        %2310 = vmatmul.mubr.f32.gmra.mrb[0].mxu0 %v2309
        %v2311 = vpop.f32.mrb[0].mxu0
        %v2312 = vadd.f32 %v2234, %v2311
        %v2313 = vpop.f32.mrb[0].mxu0
        %2314 = vdwg.mxu0
        %v2315 = vmul.f32 %v392, %v1368
        %v2316 = vmul.f32 %v393, %v1374
        %v2317 = vsub.f32 %v2306, %v2315
        %v2318 = vsub.f32 %v2312, %v2316
        %v2319 = vand.u32 2147483647, %v2317
        %v2320 = vand.u32 2147483647, %v2318
        %vm2321 = vcmp.lt.f32.partialorder %v2319, 1.0
        %vm2322 = vcmp.lt.f32.partialorder %v2320, 1.0
        %v2323 = vmul.f32 %v2317, 0.5
        %v2324 = vmul.f32 %v2318, 0.5
        %v2325 = vmul.f32 %v2323, %v2317
        %v2326 = vmul.f32 %v2324, %v2318
        %v2327 = vsub.f32 %v2319, 0.5
        %v2328 = vsub.f32 %v2320, 0.5
        %v2329 = vsel %vm2321, %v2325, %v2327
        %v2330 = vsel %vm2322, %v2326, %v2328
        %vm2331 = vcmask 130048
        %v2332 = vsel %vm2331, %v2329, 0.0
        %v2333 = vsel %vm2331, %v2330, 0.0
        %v2334 = vadd.f32 %v2332, %v2333
        %2335 = vadd.xlane.f32.xlu0 %v2334
        %v2336 = vpop.xlane.xlu0 %2335
        %v2337 = vrot.slane %v2336, 4
        %v2338 = vadd.f32 %v2336, %v2337
        %v2339 = vrot.slane %v2338, 2
        %v2340 = vadd.f32 %v2338, %v2339
        %v2341 = vrot.slane %v2340, 1
        %v2342 = vadd.f32 %v2340, %v2341
        %s2343 = vtos %v2342
        %v2344 = vsel %vm419, %v405, 0.0
        %2345 = vadd.xlane.f32.xlu0 %v2344
        %v2346 = vpop.xlane.xlu0 %2345
        %v2347 = vrot.slane %v2346, 4
        %v2348 = vadd.f32 %v2346, %v2347
        %v2349 = vrot.slane %v2348, 2
        %v2350 = vadd.f32 %v2348, %v2349
        %v2351 = vrot.slane %v2350, 1
        %v2352 = vadd.f32 %v2350, %v2351
        %s2353 = vtos %v2352
        %s2354 = smul.f32 %s2353, 4.0
        %v2355 = vstv %s2343
        %2356 = vst [vmem:[%s383] sm:$0xff] %v2355
        %v2357 = vstv %s2354
        %2358 = vst [vmem:[%s390] sm:$0xff] %v2357
        %s2359 = sand.u32 %s166, 1
        %s2360 = scalar_lea.sflag [#allocation4], %s2359
        %s2361 = sand.u32 %s166, 1
        %s2362 = smul.addr %s2361, 8
        %s2363 = scalar_lea.vmem [#allocation10], %s2362
        %s2364 = sand.u32 %s194, 1
        %s2365 = scalar_lea.sflag [#allocation12], %s2364
        %s2366 = sand.u32 %s194, 1
        %s2367 = smul.addr %s2366, 8
        %s2368 = scalar_lea.vmem [#allocation11], %s2367
        // Predicated region
        $region53: #{tpu_custom_call.1} parent=35 // pred_check
          %p2369 = pneg %p176
        $region54: #{tpu_custom_call.1} parent=35 // pred_check_branch
          %2371 = sbr.rel (%p2369) target = $region56
        $region55: #{tpu_custom_call.1} parent=35 // pred_region
          %s2373 = ssub.s32 128, 128
          %2374 = vsyncadd %s2360, %s2373
          %s2375 = sadd.s32 %s37, %s36
          %s2376 = smul.addr %s2375, 128
          %s2377 = scalar_lea.hbm %s4, %s2376
          %s2379 = sshll.u32 %s2363, 4
          %s2380 = int_to_ptr.vmem [resolvable:$true] %s2379
          %2382 = dma.vmem_to_hbm [thread:$0]  %s2380, 128, %s2377, %s2360
        $region56: #{tpu_custom_call.1} parent=35 // pred_fallthru
          _
        // Predicated region
        $region57: #{tpu_custom_call.1} parent=35 // pred_check
          %p2383 = pneg %p204
        $region58: #{tpu_custom_call.1} parent=35 // pred_check_branch
          %2385 = sbr.rel (%p2383) target = $region60
        $region59: #{tpu_custom_call.1} parent=35 // pred_region
          %s2387 = ssub.s32 128, 128
          %2388 = vsyncadd %s2365, %s2387
          %s2389 = sadd.s32 %s37, %s36
          %s2390 = smul.addr %s2389, 128
          %s2391 = scalar_lea.hbm %s5, %s2390
          %s2393 = sshll.u32 %s2368, 4
          %s2394 = int_to_ptr.vmem [resolvable:$true] %s2393
          %2396 = dma.vmem_to_hbm [thread:$0]  %s2394, 128, %s2391, %s2365
        $region60: #{tpu_custom_call.1} parent=35 // pred_fallthru
          _
      $region36: #{tpu_custom_call.1} parent=5 // pred_fallthru
        _
      %p2397 = scmp.le.s32.totalorder 2, %s27
      // Predicated region
      $region61: #{tpu_custom_call.1} parent=5 // pred_check
        %p2398 = pneg %p2397
      $region62: #{tpu_custom_call.1} parent=5 // pred_check_branch
        %2400 = sbr.rel (%p2398) target = $region64
      $region63: #{tpu_custom_call.1} parent=5 // pred_region
        %s2401 = ssub.s32 %s27, 2
        // Predicated region
        $region65: #{tpu_custom_call.1} parent=63 // pred_check
          %p2402 = pneg %p182
        $region66: #{tpu_custom_call.1} parent=63 // pred_check_branch
          %2404 = sbr.rel (%p2402) target = $region68
        $region67: #{tpu_custom_call.1} parent=63 // pred_region
          %s2405 = sand.u32 %s167, 1
          %s2406 = scalar_lea.sflag [#allocation4], %s2405
          %s2407 = sand.u32 %s167, 1
          %s2408 = smul.addr %s2407, 8
          %s2409 = scalar_lea.vmem [#allocation10], %s2408
          %2410 = dma.done %s2406, 128
        $region68: #{tpu_custom_call.1} parent=63 // pred_fallthru
          _
        // Predicated region
        $region69: #{tpu_custom_call.1} parent=63 // pred_check
          %p2411 = pneg %p210
        $region70: #{tpu_custom_call.1} parent=63 // pred_check_branch
          %2413 = sbr.rel (%p2411) target = $region72
        $region71: #{tpu_custom_call.1} parent=63 // pred_region
          %s2414 = sand.u32 %s195, 1
          %s2415 = scalar_lea.sflag [#allocation12], %s2414
          %s2416 = sand.u32 %s195, 1
          %s2417 = smul.addr %s2416, 8
          %s2418 = scalar_lea.vmem [#allocation11], %s2417
          %2419 = dma.done %s2415, 128
        $region72: #{tpu_custom_call.1} parent=63 // pred_fallthru
          _
      $region64: #{tpu_custom_call.1} parent=5 // pred_fallthru
        _
    $region6: #{tpu_custom_call.1} parent=1 // loop_footer
      %s31 = sadd.s32 1, %s27
    $region7: #{tpu_custom_call.1} parent=1 // loop_footer_branch
      %26 = sbr.rel target = $region3
    $region8: #{tpu_custom_call.1} parent=1 // loop_exit
      _
    %2420 = vsyncpa [#allocation3], 1
    %s2421 = scalar_lea.sflag [#allocation3], 1
    %2422 = vsyncpa %s2421, 1
    %2423 = vsyncpa [#allocation6], 1
    %s2424 = scalar_lea.sflag [#allocation6], 1
    %2425 = vsyncpa %s2424, 1
    %2426 = vsyncpa [#allocation9], 1
    %s2427 = scalar_lea.sflag [#allocation9], 1
    %2428 = vsyncpa %s2427, 1
    %2429 = vsyncpa [#allocation4], 1
    %s2430 = scalar_lea.sflag [#allocation4], 1
    %2431 = vsyncpa %s2430, 1
    %2432 = vsyncpa [#allocation12], 1
    %s2433 = scalar_lea.sflag [#allocation12], 1
    %2434 = vsyncpa %s2433, 1

</llo_original>
